<compile_context>
chip_gen: v5e
topology: v5e:2x2
jax: 0.10.0
libtpu: 0.0.40
codegen_flags: <defaults>
</compile_context>

<pallas_src>
import functools

import jax
import jax.numpy as jnp
from jax.experimental import pallas as pl
from jax.experimental.pallas import tpu as pltpu


# ------------------------------ static config ------------------------------

NUM_FEATURES = 8        # real node feature count
HIDDEN = 64             # real hidden width (matches module default)
NUM_CLASSES = 4         # real class count
NUM_GRAPHS = 2

F_PAD = 128             # lane-dense padded feature width
H_PAD = 128             # lane-dense padded hidden width
C_PAD = 128             # lane-dense padded class width (pad logits get -1e30 bias)
G_PAD = 8               # sublane-padded graph-row count for the pooling matrix
N_PAD = 256             # padded node count (multiple of the tile sizes)

VMEM_LIMIT = 32 * 1024 * 1024   # not a constraint here (working set << 1 MiB);
                                # tiles are chosen for grid-step count / MXU fill.


def _default_row_tile():
    """v7x has two TensorCores per chip: split rows across them (grid=(2,), parallel).
    Single-TC chips (v5e/v6e) run the whole problem in one grid step."""
    try:
        kind = jax.devices()[0].device_kind.lower()
    except Exception:
        return N_PAD
    if "v7" in kind:
        return 128
    return N_PAD


TM = _default_row_tile()


# ----------------------------- Pallas kernels ------------------------------

def _sage_conv_kernel(a_ref, x_ref, dinv_ref, mask_ref, w_ref, b_ref, o_ref):
    """One dst-row tile of SAGEConv, full reduction in a single pass:
    mean-aggregate A[dst_tile, :] @ X, concat with the tile's own features, and run
    the packed [Wl; Wr] linear (K = 2*F_PAD = 256, fills the 256-deep MXU), then
    bias + ReLU + node-mask."""
    tm = a_ref.shape[0]

    # neighbourhood sum over ALL src nodes (K collapsed), f32 accumulation on MXU
    agg = jnp.dot(a_ref[...], x_ref[...], preferred_element_type=jnp.float32)
    agg = (agg * dinv_ref[...]).astype(w_ref.dtype)          # mean aggregation

    # self features for this dst tile, sliced from the full resident X block
    row0 = pl.multiple_of(pl.program_id(0) * tm, tm)
    xi = x_ref[pl.ds(row0, tm), :]

    feats = jnp.concatenate([agg, xi], axis=-1)               # (tm, 2*F_PAD) bf16
    h = jnp.dot(feats, w_ref[...], preferred_element_type=jnp.float32) + b_ref[...]
    o_ref[...] = jnp.maximum(h, 0.0) * mask_ref[...]


def sage_conv(a_bf16, deg_inv, x, node_mask_f, w_packed, b, *, tm=TM):
    n = a_bf16.shape[0]
    f = x.shape[1]
    h = w_packed.shape[1]
    x_bf = x.astype(jnp.bfloat16)
    w_bf = w_packed.astype(jnp.bfloat16)

    cost = pl.CostEstimate(
        flops=2 * n * n * f + 4 * n * f * h,
        transcendentals=0,
        bytes_accessed=(2 * a_bf16.size + 2 * x_bf.size + 2 * w_bf.size
                        + 4 * (deg_inv.size + node_mask_f.size + b.size + n * h)),
    )

    return pl.pallas_call(
        _sage_conv_kernel,
        out_shape=jax.ShapeDtypeStruct((n, h), jnp.float32),
        grid_spec=pltpu.PrefetchScalarGridSpec(
            num_scalar_prefetch=0,
            grid=(n // tm,),
            in_specs=[
                pl.BlockSpec((tm, n), lambda i: (i, 0)),      # A rows for this tile
                pl.BlockSpec((n, f), lambda i: (0, 0)),       # X (full, resident)
                pl.BlockSpec((tm, 1), lambda i: (i, 0)),      # 1/deg for dst rows
                pl.BlockSpec((tm, 1), lambda i: (i, 0)),      # node mask for dst rows
                pl.BlockSpec((2 * f, h), lambda i: (0, 0)),   # packed [Wl; Wr]
                pl.BlockSpec((1, h), lambda i: (0, 0)),       # bias
            ],
            out_specs=pl.BlockSpec((tm, h), lambda i: (i, 0)),
        ),
        compiler_params=pltpu.CompilerParams(
            dimension_semantics=("parallel",),
            vmem_limit_bytes=VMEM_LIMIT,
        ),
        cost_estimate=cost,
    )(a_bf16, x_bf, deg_inv, node_mask_f, w_bf, b)


def _readout_kernel(m_ref, x_ref, w1_ref, b1_ref, w2_ref, b2_ref, o_ref):
    # global_mean_pool (dense pooling matrix) + fc1 + ReLU + fc2 + log_softmax(dim=1).
    # MXU operands are bf16, accumulation/exp/log in f32.  Padded class columns carry
    # a -1e30 bias so their exp() is exactly 0 and log_softmax is unchanged.
    g = jnp.dot(m_ref[...], x_ref[...], preferred_element_type=jnp.float32)
    h = (jnp.dot(g.astype(w1_ref.dtype), w1_ref[...],
                 preferred_element_type=jnp.float32) + b1_ref[...])
    h = jnp.maximum(h, 0.0)
    z = (jnp.dot(h.astype(w2_ref.dtype), w2_ref[...],
                 preferred_element_type=jnp.float32) + b2_ref[...])
    zmax = jnp.max(z, axis=1, keepdims=True)
    lse = zmax + jnp.log(jnp.sum(jnp.exp(z - zmax), axis=1, keepdims=True))
    o_ref[...] = z - lse


def readout(m, x, w1, b1, w2, b2):
    g_rows = m.shape[0]
    n = m.shape[1]
    f = x.shape[1]
    h = w1.shape[1]
    c = w2.shape[1]
    m_bf = m.astype(jnp.bfloat16)
    x_bf = x.astype(jnp.bfloat16)
    w1_bf = w1.astype(jnp.bfloat16)
    w2_bf = w2.astype(jnp.bfloat16)
    cost = pl.CostEstimate(
        flops=2 * g_rows * n * f + 2 * g_rows * f * h + 2 * g_rows * h * c,
        transcendentals=g_rows * c,
        bytes_accessed=(2 * (m_bf.size + x_bf.size + w1_bf.size + w2_bf.size)
                        + 4 * (b1.size + b2.size + g_rows * c)),
    )
    return pl.pallas_call(
        _readout_kernel,
        out_shape=jax.ShapeDtypeStruct((g_rows, c), jnp.float32),
        in_specs=[pl.BlockSpec(memory_space=pltpu.MemorySpace.VMEM)] * 6,
        out_specs=pl.BlockSpec(memory_space=pltpu.MemorySpace.VMEM),
        compiler_params=pltpu.CompilerParams(vmem_limit_bytes=VMEM_LIMIT),
        cost_estimate=cost,
    )(m_bf, x_bf, w1_bf, b1, w2_bf, b2)


# -------------------------------- JAX glue ---------------------------------

def build_adjacency(src, dst, edge_mask, n):
    """Raw scatter-added adjacency A[dst, src] (bf16) plus 1/in_degree column vector.
    Degree comes from a segment_sum over edges (no N^2 reduction pass); degree
    normalization is fused into the Pallas kernel in f32."""
    w = edge_mask.astype(jnp.float32)
    a = jnp.zeros((n, n), jnp.float32).at[dst, src].add(w)
    deg = jax.ops.segment_sum(w, dst, num_segments=n)
    deg_inv = jnp.where(deg > 0, 1.0 / jnp.where(deg > 0, deg, 1.0), 0.0)[:, None]
    return a.astype(jnp.bfloat16), deg_inv


def edge_pooling(x, src, dst, edge_mask, node_mask, batch, w_s, w_d, b_lin):
    """PyG-style EdgePooling: softmax edge score (+0.5), greedy edge contraction,
    cluster features = score * sum of member features, coalesced new edge_index.
    # TODO(synk): greedy edge contraction is sequential & data-dependent -> plain JAX
    #             (lax.fori_loop); it is the end-to-end critical path, not the Pallas
    #             kernels.  The tiny (E,) score linear / segment softmax also stay in
    #             JAX glue (no clean Pallas win at this size).
    """
    n, _ = x.shape
    e = src.shape[0]

    # edge score = Linear([x_src || x_dst]); softmax grouped by target node; +0.5
    raw = x[src] @ w_s + x[dst] @ w_d + b_lin
    raw_m = jnp.where(edge_mask, raw, jnp.float32(-1e30))
    seg_max = jax.ops.segment_max(raw_m, dst, num_segments=n)
    exp_arg = jnp.where(edge_mask, raw - seg_max[dst], 0.0)
    ex = jnp.where(edge_mask, jnp.exp(exp_arg), 0.0)
    denom = jax.ops.segment_sum(ex, dst, num_segments=n)
    score = jnp.where(edge_mask, ex / jnp.maximum(denom[dst], 1e-16), 0.0) + 0.5

    # greedy contraction in descending score order
    order = jnp.argsort(jnp.where(edge_mask, -score, jnp.inf))

    def body(k, state):
        cluster, remaining, cscore, cnt = state
        eidx = order[k]
        s = src[eidx]
        d = dst[eidx]
        can = edge_mask[eidx] & remaining[s] & remaining[d]
        cluster = jnp.where(can, cluster.at[s].set(cnt).at[d].set(cnt), cluster)
        remaining = jnp.where(can, remaining.at[s].set(False).at[d].set(False),
                              remaining)
        cscore = jnp.where(can, cscore.at[cnt].set(score[eidx]), cscore)
        cnt = cnt + can.astype(jnp.int32)
        return cluster, remaining, cscore, cnt

    init = (jnp.full((n,), -1, jnp.int32), node_mask,
            jnp.ones((n,), jnp.float32), jnp.int32(0))
    cluster, remaining, cscore, cnt = jax.lax.fori_loop(0, e, body, init)

    # remaining valid nodes become singleton clusters (increasing node index)
    rem_i = remaining.astype(jnp.int32)
    offsets = jnp.cumsum(rem_i) - rem_i
    cluster = jnp.where(remaining, cnt + offsets, cluster)
    num_clusters = cnt + jnp.sum(rem_i)

    cluster_safe = jnp.where(node_mask, cluster, 0)
    xm = jnp.where(node_mask[:, None], x, 0.0)
    new_x = jax.ops.segment_sum(xm, cluster_safe, num_segments=n)
    new_x = new_x * cscore[:, None]
    new_node_mask = jnp.arange(n) < num_clusters

    batch_m = jnp.where(node_mask, batch, -1)
    new_batch = jax.ops.segment_max(batch_m, cluster_safe, num_segments=n)
    new_batch = jnp.maximum(new_batch, 0).astype(jnp.int32)

    # coalesced new edge index (dedup; self-loops from contracted edges are kept)
    csrc = cluster_safe[src]
    cdst = cluster_safe[dst]
    key = jnp.where(edge_mask, csrc * n + cdst, n * n)  # n*n < 2^31 at this scale
    key_sorted = jnp.sort(key)
    prev = jnp.concatenate(
        [jnp.array([-1], dtype=key_sorted.dtype), key_sorted[:-1]])
    uniq = (key_sorted != prev) & (key_sorted < n * n)
    new_src = jnp.where(uniq, key_sorted // n, 0).astype(jnp.int32)
    new_dst = jnp.where(uniq, key_sorted % n, 0).astype(jnp.int32)

    return new_x, new_src, new_dst, uniq, new_node_mask, new_batch


def pooling_matrix(batch, node_mask, num_graph_rows, n):
    onehot = (batch[None, :] == jnp.arange(num_graph_rows)[:, None]) & node_mask[None, :]
    onehot = onehot.astype(jnp.float32)
    counts = jnp.sum(onehot, axis=1, keepdims=True)
    return onehot / jnp.maximum(counts, 1.0)


def init_params(key):
    ks = jax.random.split(key, 12)

    def lin(k, fan_in, fan_out):
        return (jax.random.normal(k, (fan_in, fan_out), jnp.float32)
                / jnp.sqrt(jnp.float32(fan_in)))

    def pad2(w, r, c):
        return jnp.zeros((r, c), jnp.float32).at[:w.shape[0], :w.shape[1]].set(w)

    def pack_conv(wl, wr):
        # packed [Wl; Wr]: rows 0..F_PAD-1 multiply the aggregated neighbours,
        # rows F_PAD..2*F_PAD-1 multiply the node's own features.
        return jnp.concatenate([pad2(wl, F_PAD, H_PAD), pad2(wr, F_PAD, H_PAD)], axis=0)

    def pad_pool(p):
        ws = jnp.zeros((H_PAD,), jnp.float32).at[:HIDDEN].set(p[:HIDDEN])
        wd = jnp.zeros((H_PAD,), jnp.float32).at[:HIDDEN].set(p[HIDDEN:])
        return ws, wd

    pool1_ws, pool1_wd = pad_pool(lin(ks[6], 2 * HIDDEN, 1)[:, 0])
    pool2_ws, pool2_wd = pad_pool(lin(ks[7], 2 * HIDDEN, 1)[:, 0])

    fc2_b_real = 0.01 * jax.random.normal(ks[11], (1, NUM_CLASSES), jnp.float32)
    fc2_b = jnp.full((1, C_PAD), -1e30, jnp.float32).at[:, :NUM_CLASSES].set(fc2_b_real)

    return dict(
        conv1_w=pack_conv(lin(ks[0], NUM_FEATURES, HIDDEN),
                          lin(ks[1], NUM_FEATURES, HIDDEN)),
        conv1_b=pad2(0.01 * jax.random.normal(ks[2], (1, HIDDEN), jnp.float32), 1, H_PAD),
        conv2_w=pack_conv(lin(ks[3], HIDDEN, HIDDEN),
                          lin(ks[4], HIDDEN, HIDDEN)),
        conv2_b=pad2(0.01 * jax.random.normal(ks[5], (1, HIDDEN), jnp.float32), 1, H_PAD),
        pool1_ws=pool1_ws, pool1_wd=pool1_wd, pool1_b=jnp.float32(0.0),
        pool2_ws=pool2_ws, pool2_wd=pool2_wd, pool2_b=jnp.float32(0.0),
        fc1_w=pad2(lin(ks[8], HIDDEN, HIDDEN), H_PAD, H_PAD),
        fc1_b=pad2(0.01 * jax.random.normal(ks[9], (1, HIDDEN), jnp.float32), 1, H_PAD),
        fc2_w=pad2(lin(ks[10], HIDDEN, NUM_CLASSES), H_PAD, C_PAD),
        fc2_b=fc2_b,
    )


@functools.partial(jax.jit, static_argnums=(7,))
def forward(params, x, src, dst, edge_mask, batch, node_mask, num_graphs):
    n = x.shape[0]
    nmask1 = node_mask.astype(jnp.float32)[:, None]

    # conv1 + relu + mask (single-pass Pallas kernel, fused degree-normalization)
    a1, dinv1 = build_adjacency(src, dst, edge_mask, n)
    x1 = sage_conv(a1, dinv1, x, nmask1, params['conv1_w'], params['conv1_b'])

    # pool1 (EdgePooling, JAX glue)
    x2, src2, dst2, emask2, nmask2, batch2 = edge_pooling(
        x1, src, dst, edge_mask, node_mask, batch,
        params['pool1_ws'], params['pool1_wd'], params['pool1_b'])

    # conv2 + relu + mask (Pallas)
    # TODO(synk): surviving clusters are not compacted to a smaller static bucket, so
    #             layer 2 still runs at the original padded N.
    nmask2_f = nmask2.astype(jnp.float32)[:, None]
    a2, dinv2 = build_adjacency(src2, dst2, emask2, n)
    x3 = sage_conv(a2, dinv2, x2, nmask2_f, params['conv2_w'], params['conv2_b'])

    # pool2 (EdgePooling, JAX glue)
    x4, src3, dst3, emask3, nmask3, batch3 = edge_pooling(
        x3, src2, dst2, emask2, nmask2, batch2,
        params['pool2_ws'], params['pool2_wd'], params['pool2_b'])

    # global_mean_pool + fc1 + relu + fc2 + log_softmax (Pallas, lane-dense padded)
    m = pooling_matrix(batch3, nmask3, G_PAD, n)
    logp = readout(m, x4, params['fc1_w'], params['fc1_b'],
                   params['fc2_w'], params['fc2_b'])
    return logp[:num_graphs, :NUM_CLASSES]


if __name__ == "__main__":
    # graph 0: nodes 0..6 (7 nodes); graph 1: nodes 7..11 (5 nodes)
    und_edges = [(0, 1), (1, 2), (2, 3), (3, 4), (4, 5), (5, 6), (6, 0), (0, 3),
                 (2, 5), (7, 8), (8, 9), (9, 10), (10, 11), (11, 7), (7, 9)]
    src_list, dst_list = [], []
    for a, b in und_edges:
        src_list += [a, b]
        dst_list += [b, a]

    n_nodes = 12
    num_edges = len(src_list)

    src = jnp.array(src_list, jnp.int32)
    dst = jnp.array(dst_list, jnp.int32)
    edge_mask = jnp.ones((num_edges,), bool)
    batch = jnp.array([0] * 7 + [1] * 5 + [0] * (N_PAD - n_nodes), jnp.int32)
    node_mask = jnp.arange(N_PAD) < n_nodes

    key = jax.random.PRNGKey(0)
    kx, kp = jax.random.split(key)
    x_real = jax.random.normal(kx, (n_nodes, NUM_FEATURES), jnp.float32)
    x = jnp.zeros((N_PAD, F_PAD), jnp.float32).at[:n_nodes, :NUM_FEATURES].set(x_real)
    params = init_params(kp)

    out = forward(params, x, src, dst, edge_mask, batch, node_mask, NUM_GRAPHS)
    out = jax.block_until_ready(out)

    assert out.shape == (NUM_GRAPHS, NUM_CLASSES)
    assert bool(jnp.all(jnp.isfinite(out)))
    # exp(log_softmax) rows must sum to 1
    assert bool(jnp.allclose(jnp.sum(jnp.exp(out), axis=1), 1.0, atol=1e-5))
    print("KERNEL_OK")
</pallas_src>

<mosaic_0001>
module attributes {stable_mosaic.version = 11 : i64} {
  func.func @_sage_conv_kernel(%arg0: i32, %arg1: memref<256x256xbf16, #tpu.memory_space<vmem>>, %arg2: memref<256x128xbf16, #tpu.memory_space<vmem>>, %arg3: memref<256x1xf32, #tpu.memory_space<vmem>>, %arg4: memref<256x1xf32, #tpu.memory_space<vmem>>, %arg5: memref<256x128xbf16, #tpu.memory_space<vmem>>, %arg6: memref<1x128xf32, #tpu.memory_space<vmem>>, %arg7: memref<256x128xf32, #tpu.memory_space<vmem>>) attributes {dimension_semantics = [#tpu.dimension_semantics<parallel>], iteration_bounds = array<i64: 1>, scalar_prefetch = 0 : i64, scratch_operands = 0 : i64, tpu.core_type = #tpu.core_type<tc>, window_params = [{transform_indices = @transform_0, window_bounds = array<i64: 256, 256>}, {pipeline_mode = #tpu.pipeline_mode<synchronous>, transform_indices = @transform_1, window_bounds = array<i64: 256, 128>}, {transform_indices = @transform_2, window_bounds = array<i64: 256, 1>}, {transform_indices = @transform_3, window_bounds = array<i64: 256, 1>}, {pipeline_mode = #tpu.pipeline_mode<synchronous>, transform_indices = @transform_4, window_bounds = array<i64: 256, 128>}, {pipeline_mode = #tpu.pipeline_mode<synchronous>, transform_indices = @transform_5, window_bounds = array<i64: 1, 128>}, {transform_indices = @transform_6, window_bounds = array<i64: 256, 128>}]} {
    %c0 = arith.constant 0 : index
    %c0_0 = arith.constant 0 : index
    %0 = vector.load %arg1[%c0, %c0_0] : memref<256x256xbf16, #tpu.memory_space<vmem>>, vector<256x256xbf16>
    %c0_1 = arith.constant 0 : index
    %c0_2 = arith.constant 0 : index
    %1 = vector.load %arg2[%c0_1, %c0_2] : memref<256x128xbf16, #tpu.memory_space<vmem>>, vector<256x128xbf16>
    %cst = arith.constant dense<0.000000e+00> : vector<256x128xf32>
    %2 = tpu.matmul %0, %1, %cst {dimension_numbers = #tpu.dot_dimension_numbers<[1], [0], [0], [1], [0, 0, 1, 1], [], []>} : vector<256x256xbf16>, vector<256x128xbf16>, vector<256x128xf32> -> vector<256x128xf32>
    %c0_3 = arith.constant 0 : index
    %c0_4 = arith.constant 0 : index
    %3 = vector.load %arg3[%c0_3, %c0_4] : memref<256x1xf32, #tpu.memory_space<vmem>>, vector<256x1xf32>
    %4 = vector.broadcast %3 : vector<256x1xf32> to vector<256x128xf32>
    %5 = arith.mulf %2, %4 : vector<256x128xf32>
    %6 = arith.truncf %5 : vector<256x128xf32> to vector<256x128xbf16>
    %c256_i32 = arith.constant 256 : i32
    %7 = arith.muli %arg0, %c256_i32 : i32
    %8 = tpu.assume_multiple %7, 256 : i32
    %9 = arith.index_cast %8 : i32 to index
    %c0_5 = arith.constant 0 : index
    %10 = vector.load %arg2[%9, %c0_5] : memref<256x128xbf16, #tpu.memory_space<vmem>>, vector<256x128xbf16>
    %11 = tpu.concatenate %6, %10 in 1 : vector<256x128xbf16>, vector<256x128xbf16> -> vector<256x256xbf16>
    %c0_6 = arith.constant 0 : index
    %c0_7 = arith.constant 0 : index
    %12 = vector.load %arg5[%c0_6, %c0_7] : memref<256x128xbf16, #tpu.memory_space<vmem>>, vector<256x128xbf16>
    %cst_8 = arith.constant dense<0.000000e+00> : vector<256x128xf32>
    %13 = tpu.matmul %11, %12, %cst_8 {dimension_numbers = #tpu.dot_dimension_numbers<[1], [0], [0], [1], [0, 0, 1, 1], [], []>} : vector<256x256xbf16>, vector<256x128xbf16>, vector<256x128xf32> -> vector<256x128xf32>
    %c0_9 = arith.constant 0 : index
    %c0_10 = arith.constant 0 : index
    %14 = vector.load %arg6[%c0_9, %c0_10] : memref<1x128xf32, #tpu.memory_space<vmem>>, vector<1x128xf32>
    %15 = vector.broadcast %14 : vector<1x128xf32> to vector<256x128xf32>
    %16 = arith.addf %13, %15 : vector<256x128xf32>
    %cst_11 = arith.constant 0.000000e+00 : f32
    %17 = vector.broadcast %cst_11 : f32 to vector<256x128xf32>
    %18 = arith.maximumf %16, %17 : vector<256x128xf32>
    %c0_12 = arith.constant 0 : index
    %c0_13 = arith.constant 0 : index
    %19 = vector.load %arg4[%c0_12, %c0_13] : memref<256x1xf32, #tpu.memory_space<vmem>>, vector<256x1xf32>
    %20 = vector.broadcast %19 : vector<256x1xf32> to vector<256x128xf32>
    %21 = arith.mulf %18, %20 : vector<256x128xf32>
    %c0_14 = arith.constant 0 : index
    %c0_15 = arith.constant 0 : index
    %22 = vector.load %arg7[%c0_14, %c0_15] : memref<256x128xf32, #tpu.memory_space<vmem>>, vector<256x128xf32>
    tpu.vector_store %arg7[%c0_14, %c0_15], %21 {strides = array<i32>} : memref<256x128xf32, #tpu.memory_space<vmem>>, vector<256x128xf32>,
    return
  }
  func.func @transform_0(%arg0: i32) -> (i32, i32) {
    %c0_i32 = arith.constant 0 : i32
    %c0_i32_0 = arith.constant 0 : i32
    return %arg0, %c0_i32 : i32, i32
  }
  func.func @transform_1(%arg0: i32) -> (i32, i32) {
    %c0_i32 = arith.constant 0 : i32
    %c0_i32_0 = arith.constant 0 : i32
    %c0_i32_1 = arith.constant 0 : i32
    return %c0_i32, %c0_i32_0 : i32, i32
  }
  func.func @transform_2(%arg0: i32) -> (i32, i32) {
    %c0_i32 = arith.constant 0 : i32
    %c0_i32_0 = arith.constant 0 : i32
    return %arg0, %c0_i32 : i32, i32
  }
  func.func @transform_3(%arg0: i32) -> (i32, i32) {
    %c0_i32 = arith.constant 0 : i32
    %c0_i32_0 = arith.constant 0 : i32
    return %arg0, %c0_i32 : i32, i32
  }
  func.func @transform_4(%arg0: i32) -> (i32, i32) {
    %c0_i32 = arith.constant 0 : i32
    %c0_i32_0 = arith.constant 0 : i32
    %c0_i32_1 = arith.constant 0 : i32
    return %c0_i32, %c0_i32_0 : i32, i32
  }
  func.func @transform_5(%arg0: i32) -> (i32, i32) {
    %c0_i32 = arith.constant 0 : i32
    %c0_i32_0 = arith.constant 0 : i32
    %c0_i32_1 = arith.constant 0 : i32
    return %c0_i32, %c0_i32_0 : i32, i32
  }
  func.func @transform_6(%arg0: i32) -> (i32, i32) {
    %c0_i32 = arith.constant 0 : i32
    %c0_i32_0 = arith.constant 0 : i32
    return %arg0, %c0_i32 : i32, i32
  }
}

module attributes {stable_mosaic.version = 11 : i64} {
  func.func @_readout_kernel(%arg0: memref<8x256xbf16, #tpu.memory_space<vmem>>, %arg1: memref<256x128xbf16, #tpu.memory_space<vmem>>, %arg2: memref<128x128xbf16, #tpu.memory_space<vmem>>, %arg3: memref<1x128xf32, #tpu.memory_space<vmem>>, %arg4: memref<128x128xbf16, #tpu.memory_space<vmem>>, %arg5: memref<1x128xf32, #tpu.memory_space<vmem>>, %arg6: memref<8x128xf32, #tpu.memory_space<vmem>>) attributes {dimension_semantics = [], scalar_prefetch = 0 : i64, scratch_operands = 0 : i64, tpu.core_type = #tpu.core_type<tc>} {
    %c0 = arith.constant 0 : index
    %c0_0 = arith.constant 0 : index
    %0 = vector.load %arg0[%c0, %c0_0] : memref<8x256xbf16, #tpu.memory_space<vmem>>, vector<8x256xbf16>
    %c0_1 = arith.constant 0 : index
    %c0_2 = arith.constant 0 : index
    %1 = vector.load %arg1[%c0_1, %c0_2] : memref<256x128xbf16, #tpu.memory_space<vmem>>, vector<256x128xbf16>
    %cst = arith.constant dense<0.000000e+00> : vector<8x128xf32>
    %2 = tpu.matmul %0, %1, %cst {dimension_numbers = #tpu.dot_dimension_numbers<[1], [0], [0], [1], [0, 0, 1, 1], [], []>} : vector<8x256xbf16>, vector<256x128xbf16>, vector<8x128xf32> -> vector<8x128xf32>
    %3 = arith.truncf %2 : vector<8x128xf32> to vector<8x128xbf16>
    %c0_3 = arith.constant 0 : index
    %c0_4 = arith.constant 0 : index
    %4 = vector.load %arg2[%c0_3, %c0_4] : memref<128x128xbf16, #tpu.memory_space<vmem>>, vector<128x128xbf16>
    %cst_5 = arith.constant dense<0.000000e+00> : vector<8x128xf32>
    %5 = tpu.matmul %3, %4, %cst_5 {dimension_numbers = #tpu.dot_dimension_numbers<[1], [0], [0], [1], [0, 0, 1, 1], [], []>} : vector<8x128xbf16>, vector<128x128xbf16>, vector<8x128xf32> -> vector<8x128xf32>
    %c0_6 = arith.constant 0 : index
    %c0_7 = arith.constant 0 : index
    %6 = vector.load %arg3[%c0_6, %c0_7] : memref<1x128xf32, #tpu.memory_space<vmem>>, vector<1x128xf32>
    %7 = vector.broadcast %6 : vector<1x128xf32> to vector<8x128xf32>
    %8 = arith.addf %5, %7 : vector<8x128xf32>
    %cst_8 = arith.constant 0.000000e+00 : f32
    %9 = vector.broadcast %cst_8 : f32 to vector<8x128xf32>
    %10 = arith.maximumf %8, %9 : vector<8x128xf32>
    %11 = arith.truncf %10 : vector<8x128xf32> to vector<8x128xbf16>
    %c0_9 = arith.constant 0 : index
    %c0_10 = arith.constant 0 : index
    %12 = vector.load %arg4[%c0_9, %c0_10] : memref<128x128xbf16, #tpu.memory_space<vmem>>, vector<128x128xbf16>
    %cst_11 = arith.constant dense<0.000000e+00> : vector<8x128xf32>
    %13 = tpu.matmul %11, %12, %cst_11 {dimension_numbers = #tpu.dot_dimension_numbers<[1], [0], [0], [1], [0, 0, 1, 1], [], []>} : vector<8x128xbf16>, vector<128x128xbf16>, vector<8x128xf32> -> vector<8x128xf32>
    %c0_12 = arith.constant 0 : index
    %c0_13 = arith.constant 0 : index
    %14 = vector.load %arg5[%c0_12, %c0_13] : memref<1x128xf32, #tpu.memory_space<vmem>>, vector<1x128xf32>
    %15 = vector.broadcast %14 : vector<1x128xf32> to vector<8x128xf32>
    %16 = arith.addf %13, %15 : vector<8x128xf32>
    %cst_14 = arith.constant dense<0xFF800000> : vector<8xf32>
    %17 = vector.multi_reduction <maximumf>, %16, %cst_14 [1] : vector<8x128xf32> to vector<8xf32>
    %18 = vector.shape_cast %17 : vector<8xf32> to vector<8x1xf32>
    %19 = vector.broadcast %18 : vector<8x1xf32> to vector<8x128xf32>
    %20 = arith.subf %16, %19 : vector<8x128xf32>
    %21 = math.exp %20 : vector<8x128xf32>
    %cst_15 = arith.constant dense<0.000000e+00> : vector<8xf32>
    %22 = vector.multi_reduction <add>, %21, %cst_15 [1] : vector<8x128xf32> to vector<8xf32>
    %23 = vector.shape_cast %22 : vector<8xf32> to vector<8x1xf32>
    %24 = math.log %23 : vector<8x1xf32>
    %25 = arith.addf %18, %24 : vector<8x1xf32>
    %26 = vector.broadcast %25 : vector<8x1xf32> to vector<8x128xf32>
    %27 = arith.subf %16, %26 : vector<8x128xf32>
    %c0_16 = arith.constant 0 : index
    %c0_17 = arith.constant 0 : index
    %28 = vector.load %arg6[%c0_16, %c0_17] : memref<8x128xf32, #tpu.memory_space<vmem>>, vector<8x128xf32>
    tpu.vector_store %arg6[%c0_16, %c0_17], %27 {strides = array<i32>} : memref<8x128xf32, #tpu.memory_space<vmem>>, vector<8x128xf32>,
    return
  }
}

</mosaic_0001>

<llo_original>
// kernel: custom-call.5
$region0: #{custom-call.5}
  %s0 = inlined_call_operand.vmem [shape: s32[256], index: 0, kind: output, shape index: {}]

// kernel: forward.3
$region0: #{forward.3}
  #allocation0 [shape = 'u32[]', space=smem, size = 0x4, offset = 0x4, fixed_abs, tag = 'smem constant byte address 0x4 - core index']
  #allocation1 [shape = 'u32[72,128]{1,0:T(1,128)}', space=vmem, size = 0x9000, scoped, tag = 'internal scratch']
  %s0 = inlined_call_operand.vmem [shape: bf16[256,256], index: 0, kind: input, shape index: {}]
  %s1 = inlined_call_operand.vmem [shape: bf16[256,128], index: 1, kind: input, shape index: {}]
  %s2 = inlined_call_operand.vmem [shape: f32[256,1], index: 2, kind: input, shape index: {}]
  %s3 = inlined_call_operand.vmem [shape: f32[256,1], index: 3, kind: input, shape index: {}]
  %s4 = inlined_call_operand.vmem [shape: bf16[256,128], index: 4, kind: input, shape index: {}]
  %s5 = inlined_call_operand.vmem [shape: f32[1,128], index: 5, kind: input, shape index: {}]
  %s6 = inlined_call_operand.vmem [shape: f32[256,128], index: 6, kind: output, shape index: {}]
  %s7 = sld [smem:[#allocation0]]
  $region34: #{forward.3} parent=0
    _
  %s9 = ssub.s32 1, %s7
  %s10 = scalar_select 0, %s9, %s7
  // Predicated region
  $region2: #{forward.3} parent=0 // pred_check
    _
  $region3: #{forward.3} parent=0 // pred_check_branch
    %12 = sbr.rel (0) target = $region5
  $region4: #{forward.3} parent=0 // pred_region
    _
  $region5: #{forward.3} parent=0 // pred_fallthru
    _
  // Predicated region
  $region6: #{forward.3} parent=0 // pred_check
    _
  $region7: #{forward.3} parent=0 // pred_check_branch
    %14 = sbr.rel (0) target = $region9
  $region8: #{forward.3} parent=0 // pred_region
    _
  $region9: #{forward.3} parent=0 // pred_fallthru
    _
  // Predicated region
  $region10: #{forward.3} parent=0 // pred_check
    _
  $region11: #{forward.3} parent=0 // pred_check_branch
    %16 = sbr.rel (0) target = $region13
  $region12: #{forward.3} parent=0 // pred_region
    _
  $region13: #{forward.3} parent=0 // pred_fallthru
    _
  // Predicated region
  $region14: #{forward.3} parent=0 // pred_check
    _
  $region15: #{forward.3} parent=0 // pred_check_branch
    %18 = sbr.rel (0) target = $region17
  $region16: #{forward.3} parent=0 // pred_region
    _
  $region17: #{forward.3} parent=0 // pred_fallthru
    _
  // Predicated region
  $region18: #{forward.3} parent=0 // pred_check
    _
  $region19: #{forward.3} parent=0 // pred_check_branch
    %20 = sbr.rel (0) target = $region21
  $region20: #{forward.3} parent=0 // pred_region
    _
  $region21: #{forward.3} parent=0 // pred_fallthru
    _
  // Predicated region
  $region22: #{forward.3} parent=0 // pred_check
    _
  $region23: #{forward.3} parent=0 // pred_check_branch
    %22 = sbr.rel (0) target = $region25
  $region24: #{forward.3} parent=0 // pred_region
    _
  $region25: #{forward.3} parent=0 // pred_fallthru
    _
  %v23 = vld [vmem:[%s0] sm:$0xff]
  %v24 = vld [vmem:[%s0 + $0x8] sm:$0xff]
  %v25 = vld [vmem:[%s0 + $0x10] sm:$0xff]
  %v26 = vld [vmem:[%s0 + $0x18] sm:$0xff]
  %v27 = vld [vmem:[%s0 + $0x20] sm:$0xff]
  %v28 = vld [vmem:[%s0 + $0x28] sm:$0xff]
  %v29 = vld [vmem:[%s0 + $0x30] sm:$0xff]
  %v30 = vld [vmem:[%s0 + $0x38] sm:$0xff]
  %v31 = vld [vmem:[%s0 + $0x40] sm:$0xff]
  %v32 = vld [vmem:[%s0 + $0x48] sm:$0xff]
  %v33 = vld [vmem:[%s0 + $0x50] sm:$0xff]
  %v34 = vld [vmem:[%s0 + $0x58] sm:$0xff]
  %v35 = vld [vmem:[%s0 + $0x60] sm:$0xff]
  %v36 = vld [vmem:[%s0 + $0x68] sm:$0xff]
  %v37 = vld [vmem:[%s0 + $0x70] sm:$0xff]
  %v38 = vld [vmem:[%s0 + $0x78] sm:$0xff]
  %v39 = vld [vmem:[%s0 + $0x80] sm:$0xff]
  %v40 = vld [vmem:[%s0 + $0x88] sm:$0xff]
  %v41 = vld [vmem:[%s0 + $0x90] sm:$0xff]
  %v42 = vld [vmem:[%s0 + $0x98] sm:$0xff]
  %v43 = vld [vmem:[%s0 + $0xa0] sm:$0xff]
  %v44 = vld [vmem:[%s0 + $0xa8] sm:$0xff]
  %v45 = vld [vmem:[%s0 + $0xb0] sm:$0xff]
  %v46 = vld [vmem:[%s0 + $0xb8] sm:$0xff]
  %v47 = vld [vmem:[%s0 + $0xc0] sm:$0xff]
  %v48 = vld [vmem:[%s0 + $0xc8] sm:$0xff]
  %v49 = vld [vmem:[%s0 + $0xd0] sm:$0xff]
  %v50 = vld [vmem:[%s0 + $0xd8] sm:$0xff]
  %v51 = vld [vmem:[%s0 + $0xe0] sm:$0xff]
  %v52 = vld [vmem:[%s0 + $0xe8] sm:$0xff]
  %v53 = vld [vmem:[%s0 + $0xf0] sm:$0xff]
  %v54 = vld [vmem:[%s0 + $0xf8] sm:$0xff]
  %v55 = vld [vmem:[%s1] sm:$0xf]
  %v56 = vld [vmem:[%s1 + $0x4] sm:$0xf]
  %v57 = vld [vmem:[%s1 + $0x8] sm:$0xf]
  %v58 = vld [vmem:[%s1 + $0xc] sm:$0xf]
  %v59 = vld [vmem:[%s1 + $0x10] sm:$0xf]
  %v60 = vld [vmem:[%s1 + $0x14] sm:$0xf]
  %v61 = vld [vmem:[%s1 + $0x18] sm:$0xf]
  %v62 = vld [vmem:[%s1 + $0x1c] sm:$0xf]
  %v63 = vld [vmem:[%s1 + $0x20] sm:$0xf]
  %v64 = vld [vmem:[%s1 + $0x24] sm:$0xf]
  %v65 = vld [vmem:[%s1 + $0x28] sm:$0xf]
  %v66 = vld [vmem:[%s1 + $0x2c] sm:$0xf]
  %v67 = vld [vmem:[%s1 + $0x30] sm:$0xf]
  %v68 = vld [vmem:[%s1 + $0x34] sm:$0xf]
  %v69 = vld [vmem:[%s1 + $0x38] sm:$0xf]
  %v70 = vld [vmem:[%s1 + $0x3c] sm:$0xf]
  %v71 = vld [vmem:[%s1 + $0x40] sm:$0xf]
  %v72 = vld [vmem:[%s1 + $0x44] sm:$0xf]
  %v73 = vld [vmem:[%s1 + $0x48] sm:$0xf]
  %v74 = vld [vmem:[%s1 + $0x4c] sm:$0xf]
  %v75 = vld [vmem:[%s1 + $0x50] sm:$0xf]
  %v76 = vld [vmem:[%s1 + $0x54] sm:$0xf]
  %v77 = vld [vmem:[%s1 + $0x58] sm:$0xf]
  %v78 = vld [vmem:[%s1 + $0x5c] sm:$0xf]
  %v79 = vld [vmem:[%s1 + $0x60] sm:$0xf]
  %v80 = vld [vmem:[%s1 + $0x64] sm:$0xf]
  %v81 = vld [vmem:[%s1 + $0x68] sm:$0xf]
  %v82 = vld [vmem:[%s1 + $0x6c] sm:$0xf]
  %v83 = vld [vmem:[%s1 + $0x70] sm:$0xf]
  %v84 = vld [vmem:[%s1 + $0x74] sm:$0xf]
  %v85 = vld [vmem:[%s1 + $0x78] sm:$0xf]
  %v86 = vld [vmem:[%s1 + $0x7c] sm:$0xf]
  %v119 = vunpack.c.l.b16 %v23
  %v120 = vunpack.c.h.b16 %v23
  %v121 = vunpack.c.l.b16 %v24
  %v122 = vunpack.c.h.b16 %v24
  %v123 = vunpack.c.l.b16 %v25
  %v124 = vunpack.c.h.b16 %v25
  %v125 = vunpack.c.l.b16 %v26
  %v126 = vunpack.c.h.b16 %v26
  %v127 = vunpack.c.l.b16 %v27
  %v128 = vunpack.c.h.b16 %v27
  %v129 = vunpack.c.l.b16 %v28
  %v130 = vunpack.c.h.b16 %v28
  %v131 = vunpack.c.l.b16 %v29
  %v132 = vunpack.c.h.b16 %v29
  %v133 = vunpack.c.l.b16 %v30
  %v134 = vunpack.c.h.b16 %v30
  %v135 = vunpack.c.l.b16 %v31
  %v136 = vunpack.c.h.b16 %v31
  %v137 = vunpack.c.l.b16 %v32
  %v138 = vunpack.c.h.b16 %v32
  %v139 = vunpack.c.l.b16 %v33
  %v140 = vunpack.c.h.b16 %v33
  %v141 = vunpack.c.l.b16 %v34
  %v142 = vunpack.c.h.b16 %v34
  %v143 = vunpack.c.l.b16 %v35
  %v144 = vunpack.c.h.b16 %v35
  %v145 = vunpack.c.l.b16 %v36
  %v146 = vunpack.c.h.b16 %v36
  %v147 = vunpack.c.l.b16 %v37
  %v148 = vunpack.c.h.b16 %v37
  %v149 = vunpack.c.l.b16 %v38
  %v150 = vunpack.c.h.b16 %v38
  %v151 = vunpack.c.l.b16 %v39
  %v152 = vunpack.c.h.b16 %v39
  %v153 = vunpack.c.l.b16 %v40
  %v154 = vunpack.c.h.b16 %v40
  %v155 = vunpack.c.l.b16 %v41
  %v156 = vunpack.c.h.b16 %v41
  %v157 = vunpack.c.l.b16 %v42
  %v158 = vunpack.c.h.b16 %v42
  %v159 = vunpack.c.l.b16 %v43
  %v160 = vunpack.c.h.b16 %v43
  %v161 = vunpack.c.l.b16 %v44
  %v162 = vunpack.c.h.b16 %v44
  %v163 = vunpack.c.l.b16 %v45
  %v164 = vunpack.c.h.b16 %v45
  %v165 = vunpack.c.l.b16 %v46
  %v166 = vunpack.c.h.b16 %v46
  %v167 = vunpack.c.l.b16 %v47
  %v168 = vunpack.c.h.b16 %v47
  %v169 = vunpack.c.l.b16 %v48
  %v170 = vunpack.c.h.b16 %v48
  %v171 = vunpack.c.l.b16 %v49
  %v172 = vunpack.c.h.b16 %v49
  %v173 = vunpack.c.l.b16 %v50
  %v174 = vunpack.c.h.b16 %v50
  %v175 = vunpack.c.l.b16 %v51
  %v176 = vunpack.c.h.b16 %v51
  %v177 = vunpack.c.l.b16 %v52
  %v178 = vunpack.c.h.b16 %v52
  %v179 = vunpack.c.l.b16 %v53
  %v180 = vunpack.c.h.b16 %v53
  %v181 = vunpack.c.l.b16 %v54
  %v182 = vunpack.c.h.b16 %v54
  %v183 = vpack.c.b16 %v121, %v119
  %v184 = vpack.c.b16 %v122, %v120
  %v185 = vpack.c.b16 %v125, %v123
  %v186 = vpack.c.b16 %v126, %v124
  %v187 = vpack.c.b16 %v129, %v127
  %v188 = vpack.c.b16 %v130, %v128
  %v189 = vpack.c.b16 %v133, %v131
  %v190 = vpack.c.b16 %v134, %v132
  %v191 = vpack.c.b16 %v137, %v135
  %v192 = vpack.c.b16 %v138, %v136
  %v193 = vpack.c.b16 %v141, %v139
  %v194 = vpack.c.b16 %v142, %v140
  %v195 = vpack.c.b16 %v145, %v143
  %v196 = vpack.c.b16 %v146, %v144
  %v197 = vpack.c.b16 %v149, %v147
  %v198 = vpack.c.b16 %v150, %v148
  %v199 = vpack.c.b16 %v153, %v151
  %v200 = vpack.c.b16 %v154, %v152
  %v201 = vpack.c.b16 %v157, %v155
  %v202 = vpack.c.b16 %v158, %v156
  %v203 = vpack.c.b16 %v161, %v159
  %v204 = vpack.c.b16 %v162, %v160
  %v205 = vpack.c.b16 %v165, %v163
  %v206 = vpack.c.b16 %v166, %v164
  %v207 = vpack.c.b16 %v169, %v167
  %v208 = vpack.c.b16 %v170, %v168
  %v209 = vpack.c.b16 %v173, %v171
  %v210 = vpack.c.b16 %v174, %v172
  %v211 = vpack.c.b16 %v177, %v175
  %v212 = vpack.c.b16 %v178, %v176
  %v213 = vpack.c.b16 %v181, %v179
  %v214 = vpack.c.b16 %v182, %v180
  %v279 = vunpack.c.l.b16 %v55
  %v280 = vunpack.c.l.b16 %v56
  %v281 = vunpack.c.l.b16 %v57
  %v282 = vunpack.c.l.b16 %v58
  %v283 = vunpack.c.l.b16 %v59
  %v284 = vunpack.c.l.b16 %v60
  %v285 = vunpack.c.l.b16 %v61
  %v286 = vunpack.c.l.b16 %v62
  %v287 = vunpack.c.l.b16 %v63
  %v288 = vunpack.c.l.b16 %v64
  %v289 = vunpack.c.l.b16 %v65
  %v290 = vunpack.c.l.b16 %v66
  %v291 = vunpack.c.l.b16 %v67
  %v292 = vunpack.c.l.b16 %v68
  %v293 = vunpack.c.l.b16 %v69
  %v294 = vunpack.c.l.b16 %v70
  %v295 = vunpack.c.l.b16 %v71
  %v296 = vunpack.c.l.b16 %v72
  %v297 = vunpack.c.l.b16 %v73
  %v298 = vunpack.c.l.b16 %v74
  %v299 = vunpack.c.l.b16 %v75
  %v300 = vunpack.c.l.b16 %v76
  %v301 = vunpack.c.l.b16 %v77
  %v302 = vunpack.c.l.b16 %v78
  %v303 = vunpack.c.l.b16 %v79
  %v304 = vunpack.c.l.b16 %v80
  %v305 = vunpack.c.l.b16 %v81
  %v306 = vunpack.c.l.b16 %v82
  %v307 = vunpack.c.l.b16 %v83
  %v308 = vunpack.c.l.b16 %v84
  %v309 = vunpack.c.l.b16 %v85
  %v310 = vunpack.c.l.b16 %v86
  %v311 = vpack.c.b16 %v280, %v279
  %v312 = vpack.c.b16 %v282, %v281
  %v313 = vpack.c.b16 %v284, %v283
  %v314 = vpack.c.b16 %v286, %v285
  %v315 = vpack.c.b16 %v288, %v287
  %v316 = vpack.c.b16 %v290, %v289
  %v317 = vpack.c.b16 %v292, %v291
  %v318 = vpack.c.b16 %v294, %v293
  %v319 = vpack.c.b16 %v296, %v295
  %v320 = vpack.c.b16 %v298, %v297
  %v321 = vpack.c.b16 %v300, %v299
  %v322 = vpack.c.b16 %v302, %v301
  %v323 = vpack.c.b16 %v304, %v303
  %v324 = vpack.c.b16 %v306, %v305
  %v325 = vpack.c.b16 %v308, %v307
  %v326 = vpack.c.b16 %v310, %v309
  %343 = vmatpush.bf16.msra.mxu0 %v318
  %344 = vmatpush.bf16.msra.mxu0 %v317
  %345 = vmatpush.bf16.msra.mxu0 %v316
  %346 = vmatpush.bf16.msra.mxu0 %v315
  %347 = vmatpush.bf16.msra.mxu0 %v314
  %348 = vmatpush.bf16.msra.mxu0 %v313
  %349 = vmatpush.bf16.msra.mxu0 %v312
  %350 = vmatpush.bf16.msra.mxu0 %v311
  %351 = vmatmul.bf16.gmra.mxu0 %v183
  %v352 = vpop.f32.mrf.mxu0
  %v353 = vadd.f32 0.0, %v352
  %v354 = vpop.f32.mrf.mxu0
  %v355 = vadd.f32 0.0, %v354
  %356 = vmatmul.bf16.gmra.mxu0 %v185
  %v357 = vpop.f32.mrf.mxu0
  %v358 = vadd.f32 0.0, %v357
  %v359 = vpop.f32.mrf.mxu0
  %v360 = vadd.f32 0.0, %v359
  %361 = vmatmul.bf16.gmra.mxu0 %v187
  %v362 = vpop.f32.mrf.mxu0
  %v363 = vadd.f32 0.0, %v362
  %v364 = vpop.f32.mrf.mxu0
  %v365 = vadd.f32 0.0, %v364
  %366 = vmatmul.bf16.gmra.mxu0 %v189
  %v367 = vpop.f32.mrf.mxu0
  %v368 = vadd.f32 0.0, %v367
  %v369 = vpop.f32.mrf.mxu0
  %v370 = vadd.f32 0.0, %v369
  %371 = vmatmul.bf16.gmra.mxu0 %v191
  %v372 = vpop.f32.mrf.mxu0
  %v373 = vadd.f32 0.0, %v372
  %v374 = vpop.f32.mrf.mxu0
  %v375 = vadd.f32 0.0, %v374
  %376 = vmatmul.bf16.gmra.mxu0 %v193
  %v377 = vpop.f32.mrf.mxu0
  %v378 = vadd.f32 0.0, %v377
  %v379 = vpop.f32.mrf.mxu0
  %v380 = vadd.f32 0.0, %v379
  %381 = vmatmul.bf16.gmra.mxu0 %v195
  %v382 = vpop.f32.mrf.mxu0
  %v383 = vadd.f32 0.0, %v382
  %v384 = vpop.f32.mrf.mxu0
  %v385 = vadd.f32 0.0, %v384
  %386 = vmatmul.bf16.gmra.mxu0 %v197
  %v387 = vpop.f32.mrf.mxu0
  %v388 = vadd.f32 0.0, %v387
  %v389 = vpop.f32.mrf.mxu0
  %v390 = vadd.f32 0.0, %v389
  %391 = vmatmul.bf16.gmra.mxu0 %v199
  %v392 = vpop.f32.mrf.mxu0
  %v393 = vadd.f32 0.0, %v392
  %v394 = vpop.f32.mrf.mxu0
  %v395 = vadd.f32 0.0, %v394
  %396 = vmatmul.bf16.gmra.mxu0 %v201
  %v397 = vpop.f32.mrf.mxu0
  %v398 = vadd.f32 0.0, %v397
  %v399 = vpop.f32.mrf.mxu0
  %v400 = vadd.f32 0.0, %v399
  %401 = vmatmul.bf16.gmra.mxu0 %v203
  %v402 = vpop.f32.mrf.mxu0
  %v403 = vadd.f32 0.0, %v402
  %v404 = vpop.f32.mrf.mxu0
  %v405 = vadd.f32 0.0, %v404
  %406 = vmatmul.bf16.gmra.mxu0 %v205
  %v407 = vpop.f32.mrf.mxu0
  %v408 = vadd.f32 0.0, %v407
  %v409 = vpop.f32.mrf.mxu0
  %v410 = vadd.f32 0.0, %v409
  %411 = vmatmul.bf16.gmra.mxu0 %v207
  %v412 = vpop.f32.mrf.mxu0
  %v413 = vadd.f32 0.0, %v412
  %v414 = vpop.f32.mrf.mxu0
  %v415 = vadd.f32 0.0, %v414
  %416 = vmatmul.bf16.gmra.mxu0 %v209
  %v417 = vpop.f32.mrf.mxu0
  %v418 = vadd.f32 0.0, %v417
  %v419 = vpop.f32.mrf.mxu0
  %v420 = vadd.f32 0.0, %v419
  %421 = vmatmul.bf16.gmra.mxu0 %v211
  %v422 = vpop.f32.mrf.mxu0
  %v423 = vadd.f32 0.0, %v422
  %v424 = vpop.f32.mrf.mxu0
  %v425 = vadd.f32 0.0, %v424
  %426 = vmatmul.bf16.gmra.mxu0 %v213
  %v427 = vpop.f32.mrf.mxu0
  %v428 = vadd.f32 0.0, %v427
  %v429 = vpop.f32.mrf.mxu0
  %v430 = vadd.f32 0.0, %v429
  %431 = vdwg.mxu0
  %432 = vmatpush.bf16.msra.mxu0 %v326
  %433 = vmatpush.bf16.msra.mxu0 %v325
  %434 = vmatpush.bf16.msra.mxu0 %v324
  %435 = vmatpush.bf16.msra.mxu0 %v323
  %436 = vmatpush.bf16.msra.mxu0 %v322
  %437 = vmatpush.bf16.msra.mxu0 %v321
  %438 = vmatpush.bf16.msra.mxu0 %v320
  %439 = vmatpush.bf16.msra.mxu0 %v319
  %440 = vmatmul.bf16.gmra.mxu0 %v184
  %v441 = vpop.f32.mrf.mxu0
  %v442 = vadd.f32 %v353, %v441
  %v443 = vpop.f32.mrf.mxu0
  %v444 = vadd.f32 %v355, %v443
  %445 = vmatmul.bf16.gmra.mxu0 %v186
  %v446 = vpop.f32.mrf.mxu0
  %v447 = vadd.f32 %v358, %v446
  %v448 = vpop.f32.mrf.mxu0
  %v449 = vadd.f32 %v360, %v448
  %450 = vmatmul.bf16.gmra.mxu0 %v188
  %v451 = vpop.f32.mrf.mxu0
  %v452 = vadd.f32 %v363, %v451
  %v453 = vpop.f32.mrf.mxu0
  %v454 = vadd.f32 %v365, %v453
  %455 = vmatmul.bf16.gmra.mxu0 %v190
  %v456 = vpop.f32.mrf.mxu0
  %v457 = vadd.f32 %v368, %v456
  %v458 = vpop.f32.mrf.mxu0
  %v459 = vadd.f32 %v370, %v458
  %460 = vmatmul.bf16.gmra.mxu0 %v192
  %v461 = vpop.f32.mrf.mxu0
  %v462 = vadd.f32 %v373, %v461
  %v463 = vpop.f32.mrf.mxu0
  %v464 = vadd.f32 %v375, %v463
  %465 = vmatmul.bf16.gmra.mxu0 %v194
  %v466 = vpop.f32.mrf.mxu0
  %v467 = vadd.f32 %v378, %v466
  %v468 = vpop.f32.mrf.mxu0
  %v469 = vadd.f32 %v380, %v468
  %470 = vmatmul.bf16.gmra.mxu0 %v196
  %v471 = vpop.f32.mrf.mxu0
  %v472 = vadd.f32 %v383, %v471
  %v473 = vpop.f32.mrf.mxu0
  %v474 = vadd.f32 %v385, %v473
  %475 = vmatmul.bf16.gmra.mxu0 %v198
  %v476 = vpop.f32.mrf.mxu0
  %v477 = vadd.f32 %v388, %v476
  %v478 = vpop.f32.mrf.mxu0
  %v479 = vadd.f32 %v390, %v478
  %480 = vmatmul.bf16.gmra.mxu0 %v200
  %v481 = vpop.f32.mrf.mxu0
  %v482 = vadd.f32 %v393, %v481
  %v483 = vpop.f32.mrf.mxu0
  %v484 = vadd.f32 %v395, %v483
  %485 = vmatmul.bf16.gmra.mxu0 %v202
  %v486 = vpop.f32.mrf.mxu0
  %v487 = vadd.f32 %v398, %v486
  %v488 = vpop.f32.mrf.mxu0
  %v489 = vadd.f32 %v400, %v488
  %490 = vmatmul.bf16.gmra.mxu0 %v204
  %v491 = vpop.f32.mrf.mxu0
  %v492 = vadd.f32 %v403, %v491
  %v493 = vpop.f32.mrf.mxu0
  %v494 = vadd.f32 %v405, %v493
  %495 = vmatmul.bf16.gmra.mxu0 %v206
  %v496 = vpop.f32.mrf.mxu0
  %v497 = vadd.f32 %v408, %v496
  %v498 = vpop.f32.mrf.mxu0
  %v499 = vadd.f32 %v410, %v498
  %500 = vmatmul.bf16.gmra.mxu0 %v208
  %v501 = vpop.f32.mrf.mxu0
  %v502 = vadd.f32 %v413, %v501
  %v503 = vpop.f32.mrf.mxu0
  %v504 = vadd.f32 %v415, %v503
  %505 = vmatmul.bf16.gmra.mxu0 %v210
  %v506 = vpop.f32.mrf.mxu0
  %v507 = vadd.f32 %v418, %v506
  %v508 = vpop.f32.mrf.mxu0
  %v509 = vadd.f32 %v420, %v508
  %510 = vmatmul.bf16.gmra.mxu0 %v212
  %v511 = vpop.f32.mrf.mxu0
  %v512 = vadd.f32 %v423, %v511
  %v513 = vpop.f32.mrf.mxu0
  %v514 = vadd.f32 %v425, %v513
  %515 = vmatmul.bf16.gmra.mxu0 %v214
  %v516 = vpop.f32.mrf.mxu0
  %v517 = vadd.f32 %v428, %v516
  %v518 = vpop.f32.mrf.mxu0
  %v519 = vadd.f32 %v430, %v518
  %520 = vdwg.mxu0
  %v521 = vld [vmem:[%s2] sm:$0xff]
  %v522 = vld [vmem:[%s2 + $0x8] sm:$0xff]
  %v523 = vld [vmem:[%s2 + $0x10] sm:$0xff]
  %v524 = vld [vmem:[%s2 + $0x18] sm:$0xff]
  %v525 = vld [vmem:[%s2 + $0x20] sm:$0xff]
  %v526 = vld [vmem:[%s2 + $0x28] sm:$0xff]
  %v527 = vld [vmem:[%s2 + $0x30] sm:$0xff]
  %v528 = vld [vmem:[%s2 + $0x38] sm:$0xff]
  %v529 = vld [vmem:[%s2 + $0x40] sm:$0xff]
  %v530 = vld [vmem:[%s2 + $0x48] sm:$0xff]
  %v531 = vld [vmem:[%s2 + $0x50] sm:$0xff]
  %v532 = vld [vmem:[%s2 + $0x58] sm:$0xff]
  %v533 = vld [vmem:[%s2 + $0x60] sm:$0xff]
  %v534 = vld [vmem:[%s2 + $0x68] sm:$0xff]
  %v535 = vld [vmem:[%s2 + $0x70] sm:$0xff]
  %v536 = vld [vmem:[%s2 + $0x78] sm:$0xff]
  %v537 = vld [vmem:[%s2 + $0x80] sm:$0xff]
  %v538 = vld [vmem:[%s2 + $0x88] sm:$0xff]
  %v539 = vld [vmem:[%s2 + $0x90] sm:$0xff]
  %v540 = vld [vmem:[%s2 + $0x98] sm:$0xff]
  %v541 = vld [vmem:[%s2 + $0xa0] sm:$0xff]
  %v542 = vld [vmem:[%s2 + $0xa8] sm:$0xff]
  %v543 = vld [vmem:[%s2 + $0xb0] sm:$0xff]
  %v544 = vld [vmem:[%s2 + $0xb8] sm:$0xff]
  %v545 = vld [vmem:[%s2 + $0xc0] sm:$0xff]
  %v546 = vld [vmem:[%s2 + $0xc8] sm:$0xff]
  %v547 = vld [vmem:[%s2 + $0xd0] sm:$0xff]
  %v548 = vld [vmem:[%s2 + $0xd8] sm:$0xff]
  %v549 = vld [vmem:[%s2 + $0xe0] sm:$0xff]
  %v550 = vld [vmem:[%s2 + $0xe8] sm:$0xff]
  %v551 = vld [vmem:[%s2 + $0xf0] sm:$0xff]
  %v552 = vld [vmem:[%s2 + $0xf8] sm:$0xff]
  %554 = vset.pattern.permute.xlu0 0
  %555 = vperm.xlu0 %554, %v521
  %v556 = vpop.permute.xlu0 %555
  %559 = vset.pattern.permute.xlu0 0
  %560 = vperm.xlu0 %559, %v522
  %v561 = vpop.permute.xlu0 %560
  %564 = vset.pattern.permute.xlu0 0
  %565 = vperm.xlu0 %564, %v523
  %v566 = vpop.permute.xlu0 %565
  %569 = vset.pattern.permute.xlu0 0
  %570 = vperm.xlu0 %569, %v524
  %v571 = vpop.permute.xlu0 %570
  %574 = vset.pattern.permute.xlu0 0
  %575 = vperm.xlu0 %574, %v525
  %v576 = vpop.permute.xlu0 %575
  %579 = vset.pattern.permute.xlu0 0
  %580 = vperm.xlu0 %579, %v526
  %v581 = vpop.permute.xlu0 %580
  %584 = vset.pattern.permute.xlu0 0
  %585 = vperm.xlu0 %584, %v527
  %v586 = vpop.permute.xlu0 %585
  %589 = vset.pattern.permute.xlu0 0
  %590 = vperm.xlu0 %589, %v528
  %v591 = vpop.permute.xlu0 %590
  %594 = vset.pattern.permute.xlu0 0
  %595 = vperm.xlu0 %594, %v529
  %v596 = vpop.permute.xlu0 %595
  %599 = vset.pattern.permute.xlu0 0
  %600 = vperm.xlu0 %599, %v530
  %v601 = vpop.permute.xlu0 %600
  %604 = vset.pattern.permute.xlu0 0
  %605 = vperm.xlu0 %604, %v531
  %v606 = vpop.permute.xlu0 %605
  %609 = vset.pattern.permute.xlu0 0
  %610 = vperm.xlu0 %609, %v532
  %v611 = vpop.permute.xlu0 %610
  %614 = vset.pattern.permute.xlu0 0
  %615 = vperm.xlu0 %614, %v533
  %v616 = vpop.permute.xlu0 %615
  %619 = vset.pattern.permute.xlu0 0
  %620 = vperm.xlu0 %619, %v534
  %v621 = vpop.permute.xlu0 %620
  %624 = vset.pattern.permute.xlu0 0
  %625 = vperm.xlu0 %624, %v535
  %v626 = vpop.permute.xlu0 %625
  %629 = vset.pattern.permute.xlu0 0
  %630 = vperm.xlu0 %629, %v536
  %v631 = vpop.permute.xlu0 %630
  %634 = vset.pattern.permute.xlu0 0
  %635 = vperm.xlu0 %634, %v537
  %v636 = vpop.permute.xlu0 %635
  %639 = vset.pattern.permute.xlu0 0
  %640 = vperm.xlu0 %639, %v538
  %v641 = vpop.permute.xlu0 %640
  %644 = vset.pattern.permute.xlu0 0
  %645 = vperm.xlu0 %644, %v539
  %v646 = vpop.permute.xlu0 %645
  %649 = vset.pattern.permute.xlu0 0
  %650 = vperm.xlu0 %649, %v540
  %v651 = vpop.permute.xlu0 %650
  %654 = vset.pattern.permute.xlu0 0
  %655 = vperm.xlu0 %654, %v541
  %v656 = vpop.permute.xlu0 %655
  %659 = vset.pattern.permute.xlu0 0
  %660 = vperm.xlu0 %659, %v542
  %v661 = vpop.permute.xlu0 %660
  %664 = vset.pattern.permute.xlu0 0
  %665 = vperm.xlu0 %664, %v543
  %v666 = vpop.permute.xlu0 %665
  %669 = vset.pattern.permute.xlu0 0
  %670 = vperm.xlu0 %669, %v544
  %v671 = vpop.permute.xlu0 %670
  %674 = vset.pattern.permute.xlu0 0
  %675 = vperm.xlu0 %674, %v545
  %v676 = vpop.permute.xlu0 %675
  %679 = vset.pattern.permute.xlu0 0
  %680 = vperm.xlu0 %679, %v546
  %v681 = vpop.permute.xlu0 %680
  %684 = vset.pattern.permute.xlu0 0
  %685 = vperm.xlu0 %684, %v547
  %v686 = vpop.permute.xlu0 %685
  %689 = vset.pattern.permute.xlu0 0
  %690 = vperm.xlu0 %689, %v548
  %v691 = vpop.permute.xlu0 %690
  %694 = vset.pattern.permute.xlu0 0
  %695 = vperm.xlu0 %694, %v549
  %v696 = vpop.permute.xlu0 %695
  %699 = vset.pattern.permute.xlu0 0
  %700 = vperm.xlu0 %699, %v550
  %v701 = vpop.permute.xlu0 %700
  %704 = vset.pattern.permute.xlu0 0
  %705 = vperm.xlu0 %704, %v551
  %v706 = vpop.permute.xlu0 %705
  %709 = vset.pattern.permute.xlu0 0
  %710 = vperm.xlu0 %709, %v552
  %v711 = vpop.permute.xlu0 %710
  %v713 = vmul.f32 %v442, %v556
  %v714 = vmul.f32 %v444, %v561
  %v715 = vmul.f32 %v447, %v566
  %v716 = vmul.f32 %v449, %v571
  %v717 = vmul.f32 %v452, %v576
  %v718 = vmul.f32 %v454, %v581
  %v719 = vmul.f32 %v457, %v586
  %v720 = vmul.f32 %v459, %v591
  %v721 = vmul.f32 %v462, %v596
  %v722 = vmul.f32 %v464, %v601
  %v723 = vmul.f32 %v467, %v606
  %v724 = vmul.f32 %v469, %v611
  %v725 = vmul.f32 %v472, %v616
  %v726 = vmul.f32 %v474, %v621
  %v727 = vmul.f32 %v477, %v626
  %v728 = vmul.f32 %v479, %v631
  %v729 = vmul.f32 %v482, %v636
  %v730 = vmul.f32 %v484, %v641
  %v731 = vmul.f32 %v487, %v646
  %v732 = vmul.f32 %v489, %v651
  %v733 = vmul.f32 %v492, %v656
  %v734 = vmul.f32 %v494, %v661
  %v735 = vmul.f32 %v497, %v666
  %v736 = vmul.f32 %v499, %v671
  %v737 = vmul.f32 %v502, %v676
  %v738 = vmul.f32 %v504, %v681
  %v739 = vmul.f32 %v507, %v686
  %v740 = vmul.f32 %v509, %v691
  %v741 = vmul.f32 %v512, %v696
  %v742 = vmul.f32 %v514, %v701
  %v743 = vmul.f32 %v517, %v706
  %v744 = vmul.f32 %v519, %v711
  %v745 = vpack.c.bf16 %v713, %v713
  %v746 = vpack.c.bf16 %v714, %v714
  %v747 = vpack.c.bf16 %v715, %v715
  %v748 = vpack.c.bf16 %v716, %v716
  %v749 = vpack.c.bf16 %v717, %v717
  %v750 = vpack.c.bf16 %v718, %v718
  %v751 = vpack.c.bf16 %v719, %v719
  %v752 = vpack.c.bf16 %v720, %v720
  %v753 = vpack.c.bf16 %v721, %v721
  %v754 = vpack.c.bf16 %v722, %v722
  %v755 = vpack.c.bf16 %v723, %v723
  %v756 = vpack.c.bf16 %v724, %v724
  %v757 = vpack.c.bf16 %v725, %v725
  %v758 = vpack.c.bf16 %v726, %v726
  %v759 = vpack.c.bf16 %v727, %v727
  %v760 = vpack.c.bf16 %v728, %v728
  %v761 = vpack.c.bf16 %v729, %v729
  %v762 = vpack.c.bf16 %v730, %v730
  %v763 = vpack.c.bf16 %v731, %v731
  %v764 = vpack.c.bf16 %v732, %v732
  %v765 = vpack.c.bf16 %v733, %v733
  %v766 = vpack.c.bf16 %v734, %v734
  %v767 = vpack.c.bf16 %v735, %v735
  %v768 = vpack.c.bf16 %v736, %v736
  %v769 = vpack.c.bf16 %v737, %v737
  %v770 = vpack.c.bf16 %v738, %v738
  %v771 = vpack.c.bf16 %v739, %v739
  %v772 = vpack.c.bf16 %v740, %v740
  %v773 = vpack.c.bf16 %v741, %v741
  %v774 = vpack.c.bf16 %v742, %v742
  %v775 = vpack.c.bf16 %v743, %v743
  %v776 = vpack.c.bf16 %v744, %v744
  %s777 = smul.u32 0, 256
  %s778 = sshra.s32 %s777, 3
  %s779 = sand.u32 %s777, 7
  %s780 = smul.addr %s778, 4
  %s781 = scalar_lea.vmem %s1, %s780
  %v782 = vld [vmem:[%s781] sm:$0xf]
  %v783 = vld [vmem:[%s781 + $0x4] sm:$0xf]
  %v784 = vld [vmem:[%s781 + $0x8] sm:$0xf]
  %v785 = vld [vmem:[%s781 + $0xc] sm:$0xf]
  %v786 = vld [vmem:[%s781 + $0x10] sm:$0xf]
  %v787 = vld [vmem:[%s781 + $0x14] sm:$0xf]
  %v788 = vld [vmem:[%s781 + $0x18] sm:$0xf]
  %v789 = vld [vmem:[%s781 + $0x1c] sm:$0xf]
  %v790 = vld [vmem:[%s781 + $0x20] sm:$0xf]
  %v791 = vld [vmem:[%s781 + $0x24] sm:$0xf]
  %v792 = vld [vmem:[%s781 + $0x28] sm:$0xf]
  %v793 = vld [vmem:[%s781 + $0x2c] sm:$0xf]
  %v794 = vld [vmem:[%s781 + $0x30] sm:$0xf]
  %v795 = vld [vmem:[%s781 + $0x34] sm:$0xf]
  %v796 = vld [vmem:[%s781 + $0x38] sm:$0xf]
  %v797 = vld [vmem:[%s781 + $0x3c] sm:$0xf]
  %v798 = vld [vmem:[%s781 + $0x40] sm:$0xf]
  %v799 = vld [vmem:[%s781 + $0x44] sm:$0xf]
  %v800 = vld [vmem:[%s781 + $0x48] sm:$0xf]
  %v801 = vld [vmem:[%s781 + $0x4c] sm:$0xf]
  %v802 = vld [vmem:[%s781 + $0x50] sm:$0xf]
  %v803 = vld [vmem:[%s781 + $0x54] sm:$0xf]
  %v804 = vld [vmem:[%s781 + $0x58] sm:$0xf]
  %v805 = vld [vmem:[%s781 + $0x5c] sm:$0xf]
  %v806 = vld [vmem:[%s781 + $0x60] sm:$0xf]
  %v807 = vld [vmem:[%s781 + $0x64] sm:$0xf]
  %v808 = vld [vmem:[%s781 + $0x68] sm:$0xf]
  %v809 = vld [vmem:[%s781 + $0x6c] sm:$0xf]
  %v810 = vld [vmem:[%s781 + $0x70] sm:$0xf]
  %v811 = vld [vmem:[%s781 + $0x74] sm:$0xf]
  %v812 = vld [vmem:[%s781 + $0x78] sm:$0xf]
  %v813 = vld [vmem:[%s781 + $0x7c] sm:$0xf]
  %v846 = vunpack.c.l.b16 %v745
  %v847 = vunpack.c.l.b16 %v746
  %v848 = vunpack.c.l.b16 %v747
  %v849 = vunpack.c.l.b16 %v748
  %v850 = vunpack.c.l.b16 %v749
  %v851 = vunpack.c.l.b16 %v750
  %v852 = vunpack.c.l.b16 %v751
  %v853 = vunpack.c.l.b16 %v752
  %v854 = vunpack.c.l.b16 %v753
  %v855 = vunpack.c.l.b16 %v754
  %v856 = vunpack.c.l.b16 %v755
  %v857 = vunpack.c.l.b16 %v756
  %v858 = vunpack.c.l.b16 %v757
  %v859 = vunpack.c.l.b16 %v758
  %v860 = vunpack.c.l.b16 %v759
  %v861 = vunpack.c.l.b16 %v760
  %v862 = vunpack.c.l.b16 %v761
  %v863 = vunpack.c.l.b16 %v762
  %v864 = vunpack.c.l.b16 %v763
  %v865 = vunpack.c.l.b16 %v764
  %v866 = vunpack.c.l.b16 %v765
  %v867 = vunpack.c.l.b16 %v766
  %v868 = vunpack.c.l.b16 %v767
  %v869 = vunpack.c.l.b16 %v768
  %v870 = vunpack.c.l.b16 %v769
  %v871 = vunpack.c.l.b16 %v770
  %v872 = vunpack.c.l.b16 %v771
  %v873 = vunpack.c.l.b16 %v772
  %v874 = vunpack.c.l.b16 %v773
  %v875 = vunpack.c.l.b16 %v774
  %v876 = vunpack.c.l.b16 %v775
  %v877 = vunpack.c.l.b16 %v776
  %v878 = vpack.c.b16 %v847, %v846
  %v879 = vpack.c.b16 %v849, %v848
  %v880 = vpack.c.b16 %v851, %v850
  %v881 = vpack.c.b16 %v853, %v852
  %v882 = vpack.c.b16 %v855, %v854
  %v883 = vpack.c.b16 %v857, %v856
  %v884 = vpack.c.b16 %v859, %v858
  %v885 = vpack.c.b16 %v861, %v860
  %v886 = vpack.c.b16 %v863, %v862
  %v887 = vpack.c.b16 %v865, %v864
  %v888 = vpack.c.b16 %v867, %v866
  %v889 = vpack.c.b16 %v869, %v868
  %v890 = vpack.c.b16 %v871, %v870
  %v891 = vpack.c.b16 %v873, %v872
  %v892 = vpack.c.b16 %v875, %v874
  %v893 = vpack.c.b16 %v877, %v876
  %v942 = vunpack.c.l.b16 %v782
  %v943 = vunpack.c.l.b16 %v783
  %v944 = vunpack.c.l.b16 %v784
  %v945 = vunpack.c.l.b16 %v785
  %v946 = vunpack.c.l.b16 %v786
  %v947 = vunpack.c.l.b16 %v787
  %v948 = vunpack.c.l.b16 %v788
  %v949 = vunpack.c.l.b16 %v789
  %v950 = vunpack.c.l.b16 %v790
  %v951 = vunpack.c.l.b16 %v791
  %v952 = vunpack.c.l.b16 %v792
  %v953 = vunpack.c.l.b16 %v793
  %v954 = vunpack.c.l.b16 %v794
  %v955 = vunpack.c.l.b16 %v795
  %v956 = vunpack.c.l.b16 %v796
  %v957 = vunpack.c.l.b16 %v797
  %v958 = vunpack.c.l.b16 %v798
  %v959 = vunpack.c.l.b16 %v799
  %v960 = vunpack.c.l.b16 %v800
  %v961 = vunpack.c.l.b16 %v801
  %v962 = vunpack.c.l.b16 %v802
  %v963 = vunpack.c.l.b16 %v803
  %v964 = vunpack.c.l.b16 %v804
  %v965 = vunpack.c.l.b16 %v805
  %v966 = vunpack.c.l.b16 %v806
  %v967 = vunpack.c.l.b16 %v807
  %v968 = vunpack.c.l.b16 %v808
  %v969 = vunpack.c.l.b16 %v809
  %v970 = vunpack.c.l.b16 %v810
  %v971 = vunpack.c.l.b16 %v811
  %v972 = vunpack.c.l.b16 %v812
  %v973 = vunpack.c.l.b16 %v813
  %v974 = vpack.c.b16 %v943, %v942
  %v975 = vpack.c.b16 %v945, %v944
  %v976 = vpack.c.b16 %v947, %v946
  %v977 = vpack.c.b16 %v949, %v948
  %v978 = vpack.c.b16 %v951, %v950
  %v979 = vpack.c.b16 %v953, %v952
  %v980 = vpack.c.b16 %v955, %v954
  %v981 = vpack.c.b16 %v957, %v956
  %v982 = vpack.c.b16 %v959, %v958
  %v983 = vpack.c.b16 %v961, %v960
  %v984 = vpack.c.b16 %v963, %v962
  %v985 = vpack.c.b16 %v965, %v964
  %v986 = vpack.c.b16 %v967, %v966
  %v987 = vpack.c.b16 %v969, %v968
  %v988 = vpack.c.b16 %v971, %v970
  %v989 = vpack.c.b16 %v973, %v972
  %v1006 = vld [vmem:[%s4] sm:$0xf]
  %v1007 = vld [vmem:[%s4 + $0x4] sm:$0xf]
  %v1008 = vld [vmem:[%s4 + $0x8] sm:$0xf]
  %v1009 = vld [vmem:[%s4 + $0xc] sm:$0xf]
  %v1010 = vld [vmem:[%s4 + $0x10] sm:$0xf]
  %v1011 = vld [vmem:[%s4 + $0x14] sm:$0xf]
  %v1012 = vld [vmem:[%s4 + $0x18] sm:$0xf]
  %v1013 = vld [vmem:[%s4 + $0x1c] sm:$0xf]
  %v1014 = vld [vmem:[%s4 + $0x20] sm:$0xf]
  %v1015 = vld [vmem:[%s4 + $0x24] sm:$0xf]
  %v1016 = vld [vmem:[%s4 + $0x28] sm:$0xf]
  %v1017 = vld [vmem:[%s4 + $0x2c] sm:$0xf]
  %v1018 = vld [vmem:[%s4 + $0x30] sm:$0xf]
  %v1019 = vld [vmem:[%s4 + $0x34] sm:$0xf]
  %v1020 = vld [vmem:[%s4 + $0x38] sm:$0xf]
  %v1021 = vld [vmem:[%s4 + $0x3c] sm:$0xf]
  %v1022 = vld [vmem:[%s4 + $0x40] sm:$0xf]
  %v1023 = vld [vmem:[%s4 + $0x44] sm:$0xf]
  %v1024 = vld [vmem:[%s4 + $0x48] sm:$0xf]
  %v1025 = vld [vmem:[%s4 + $0x4c] sm:$0xf]
  %v1026 = vld [vmem:[%s4 + $0x50] sm:$0xf]
  %v1027 = vld [vmem:[%s4 + $0x54] sm:$0xf]
  %v1028 = vld [vmem:[%s4 + $0x58] sm:$0xf]
  %v1029 = vld [vmem:[%s4 + $0x5c] sm:$0xf]
  %v1030 = vld [vmem:[%s4 + $0x60] sm:$0xf]
  %v1031 = vld [vmem:[%s4 + $0x64] sm:$0xf]
  %v1032 = vld [vmem:[%s4 + $0x68] sm:$0xf]
  %v1033 = vld [vmem:[%s4 + $0x6c] sm:$0xf]
  %v1034 = vld [vmem:[%s4 + $0x70] sm:$0xf]
  %v1035 = vld [vmem:[%s4 + $0x74] sm:$0xf]
  %v1036 = vld [vmem:[%s4 + $0x78] sm:$0xf]
  %v1037 = vld [vmem:[%s4 + $0x7c] sm:$0xf]
  %v1038 = vld [vmem:[%s5] sm:$0x1]
  %v1040 = vperm.slane %v1038, 0
  %v1074 = vunpack.c.l.b16 %v1006
  %v1075 = vunpack.c.l.b16 %v1007
  %v1076 = vunpack.c.l.b16 %v1008
  %v1077 = vunpack.c.l.b16 %v1009
  %v1078 = vunpack.c.l.b16 %v1010
  %v1079 = vunpack.c.l.b16 %v1011
  %v1080 = vunpack.c.l.b16 %v1012
  %v1081 = vunpack.c.l.b16 %v1013
  %v1082 = vunpack.c.l.b16 %v1014
  %v1083 = vunpack.c.l.b16 %v1015
  %v1084 = vunpack.c.l.b16 %v1016
  %v1085 = vunpack.c.l.b16 %v1017
  %v1086 = vunpack.c.l.b16 %v1018
  %v1087 = vunpack.c.l.b16 %v1019
  %v1088 = vunpack.c.l.b16 %v1020
  %v1089 = vunpack.c.l.b16 %v1021
  %v1090 = vunpack.c.l.b16 %v1022
  %v1091 = vunpack.c.l.b16 %v1023
  %v1092 = vunpack.c.l.b16 %v1024
  %v1093 = vunpack.c.l.b16 %v1025
  %v1094 = vunpack.c.l.b16 %v1026
  %v1095 = vunpack.c.l.b16 %v1027
  %v1096 = vunpack.c.l.b16 %v1028
  %v1097 = vunpack.c.l.b16 %v1029
  %v1098 = vunpack.c.l.b16 %v1030
  %v1099 = vunpack.c.l.b16 %v1031
  %v1100 = vunpack.c.l.b16 %v1032
  %v1101 = vunpack.c.l.b16 %v1033
  %v1102 = vunpack.c.l.b16 %v1034
  %v1103 = vunpack.c.l.b16 %v1035
  %v1104 = vunpack.c.l.b16 %v1036
  %v1105 = vunpack.c.l.b16 %v1037
  %v1106 = vpack.c.b16 %v1075, %v1074
  %v1107 = vpack.c.b16 %v1077, %v1076
  %v1108 = vpack.c.b16 %v1079, %v1078
  %v1109 = vpack.c.b16 %v1081, %v1080
  %v1110 = vpack.c.b16 %v1083, %v1082
  %v1111 = vpack.c.b16 %v1085, %v1084
  %v1112 = vpack.c.b16 %v1087, %v1086
  %v1113 = vpack.c.b16 %v1089, %v1088
  %v1114 = vpack.c.b16 %v1091, %v1090
  %v1115 = vpack.c.b16 %v1093, %v1092
  %v1116 = vpack.c.b16 %v1095, %v1094
  %v1117 = vpack.c.b16 %v1097, %v1096
  %v1118 = vpack.c.b16 %v1099, %v1098
  %v1119 = vpack.c.b16 %v1101, %v1100
  %v1120 = vpack.c.b16 %v1103, %v1102
  %v1121 = vpack.c.b16 %v1105, %v1104
  %1138 = vmatpush.bf16.msra.mxu0 %v1113
  %1139 = vmatpush.bf16.msra.mxu0 %v1112
  %1140 = vmatpush.bf16.msra.mxu0 %v1111
  %1141 = vmatpush.bf16.msra.mxu0 %v1110
  %1142 = vmatpush.bf16.msra.mxu0 %v1109
  %1143 = vmatpush.bf16.msra.mxu0 %v1108
  %1144 = vmatpush.bf16.msra.mxu0 %v1107
  %1145 = vmatpush.bf16.msra.mxu0 %v1106
  %1146 = vmatmul.bf16.gmra.mxu0 %v878
  %v1147 = vpop.f32.mrf.mxu0
  %v1148 = vadd.f32 %v1040, %v1147
  %v1149 = vpop.f32.mrf.mxu0
  %v1150 = vadd.f32 %v1040, %v1149
  %1151 = vmatmul.bf16.gmra.mxu0 %v879
  %v1152 = vpop.f32.mrf.mxu0
  %v1153 = vadd.f32 %v1040, %v1152
  %v1154 = vpop.f32.mrf.mxu0
  %v1155 = vadd.f32 %v1040, %v1154
  %1156 = vmatmul.bf16.gmra.mxu0 %v880
  %v1157 = vpop.f32.mrf.mxu0
  %v1158 = vadd.f32 %v1040, %v1157
  %v1159 = vpop.f32.mrf.mxu0
  %v1160 = vadd.f32 %v1040, %v1159
  %1161 = vmatmul.bf16.gmra.mxu0 %v881
  %v1162 = vpop.f32.mrf.mxu0
  %v1163 = vadd.f32 %v1040, %v1162
  %v1164 = vpop.f32.mrf.mxu0
  %v1165 = vadd.f32 %v1040, %v1164
  %1166 = vmatmul.bf16.gmra.mxu0 %v882
  %v1167 = vpop.f32.mrf.mxu0
  %v1168 = vadd.f32 %v1040, %v1167
  %v1169 = vpop.f32.mrf.mxu0
  %v1170 = vadd.f32 %v1040, %v1169
  %1171 = vmatmul.bf16.gmra.mxu0 %v883
  %v1172 = vpop.f32.mrf.mxu0
  %v1173 = vadd.f32 %v1040, %v1172
  %v1174 = vpop.f32.mrf.mxu0
  %v1175 = vadd.f32 %v1040, %v1174
  %1176 = vmatmul.bf16.gmra.mxu0 %v884
  %v1177 = vpop.f32.mrf.mxu0
  %v1178 = vadd.f32 %v1040, %v1177
  %v1179 = vpop.f32.mrf.mxu0
  %v1180 = vadd.f32 %v1040, %v1179
  %1181 = vmatmul.bf16.gmra.mxu0 %v885
  %v1182 = vpop.f32.mrf.mxu0
  %v1183 = vadd.f32 %v1040, %v1182
  %v1184 = vpop.f32.mrf.mxu0
  %v1185 = vadd.f32 %v1040, %v1184
  %1186 = vmatmul.bf16.gmra.mxu0 %v886
  %v1187 = vpop.f32.mrf.mxu0
  %v1188 = vadd.f32 %v1040, %v1187
  %v1189 = vpop.f32.mrf.mxu0
  %v1190 = vadd.f32 %v1040, %v1189
  %1191 = vmatmul.bf16.gmra.mxu0 %v887
  %v1192 = vpop.f32.mrf.mxu0
  %v1193 = vadd.f32 %v1040, %v1192
  %v1194 = vpop.f32.mrf.mxu0
  %v1195 = vadd.f32 %v1040, %v1194
  %1196 = vmatmul.bf16.gmra.mxu0 %v888
  %v1197 = vpop.f32.mrf.mxu0
  %v1198 = vadd.f32 %v1040, %v1197
  %v1199 = vpop.f32.mrf.mxu0
  %v1200 = vadd.f32 %v1040, %v1199
  %1201 = vmatmul.bf16.gmra.mxu0 %v889
  %v1202 = vpop.f32.mrf.mxu0
  %v1203 = vadd.f32 %v1040, %v1202
  %v1204 = vpop.f32.mrf.mxu0
  %v1205 = vadd.f32 %v1040, %v1204
  %1206 = vmatmul.bf16.gmra.mxu0 %v890
  %v1207 = vpop.f32.mrf.mxu0
  %v1208 = vadd.f32 %v1040, %v1207
  %v1209 = vpop.f32.mrf.mxu0
  %v1210 = vadd.f32 %v1040, %v1209
  %1211 = vmatmul.bf16.gmra.mxu0 %v891
  %v1212 = vpop.f32.mrf.mxu0
  %v1213 = vadd.f32 %v1040, %v1212
  %v1214 = vpop.f32.mrf.mxu0
  %v1215 = vadd.f32 %v1040, %v1214
  %1216 = vmatmul.bf16.gmra.mxu0 %v892
  %v1217 = vpop.f32.mrf.mxu0
  %v1218 = vadd.f32 %v1040, %v1217
  %v1219 = vpop.f32.mrf.mxu0
  %v1220 = vadd.f32 %v1040, %v1219
  %1221 = vmatmul.bf16.gmra.mxu0 %v893
  %v1222 = vpop.f32.mrf.mxu0
  %v1223 = vadd.f32 %v1040, %v1222
  %v1224 = vpop.f32.mrf.mxu0
  %v1225 = vadd.f32 %v1040, %v1224
  %1226 = vdwg.mxu0
  %1227 = vmatpush.bf16.msra.mxu0 %v1121
  %1228 = vmatpush.bf16.msra.mxu0 %v1120
  %1229 = vmatpush.bf16.msra.mxu0 %v1119
  %1230 = vmatpush.bf16.msra.mxu0 %v1118
  %1231 = vmatpush.bf16.msra.mxu0 %v1117
  %1232 = vmatpush.bf16.msra.mxu0 %v1116
  %1233 = vmatpush.bf16.msra.mxu0 %v1115
  %1234 = vmatpush.bf16.msra.mxu0 %v1114
  %1235 = vmatmul.bf16.gmra.mxu0 %v974
  %v1236 = vpop.f32.mrf.mxu0
  %v1237 = vadd.f32 %v1148, %v1236
  %v1238 = vpop.f32.mrf.mxu0
  %v1239 = vadd.f32 %v1150, %v1238
  %1240 = vmatmul.bf16.gmra.mxu0 %v975
  %v1241 = vpop.f32.mrf.mxu0
  %v1242 = vadd.f32 %v1153, %v1241
  %v1243 = vpop.f32.mrf.mxu0
  %v1244 = vadd.f32 %v1155, %v1243
  %1245 = vmatmul.bf16.gmra.mxu0 %v976
  %v1246 = vpop.f32.mrf.mxu0
  %v1247 = vadd.f32 %v1158, %v1246
  %v1248 = vpop.f32.mrf.mxu0
  %v1249 = vadd.f32 %v1160, %v1248
  %1250 = vmatmul.bf16.gmra.mxu0 %v977
  %v1251 = vpop.f32.mrf.mxu0
  %v1252 = vadd.f32 %v1163, %v1251
  %v1253 = vpop.f32.mrf.mxu0
  %v1254 = vadd.f32 %v1165, %v1253
  %1255 = vmatmul.bf16.gmra.mxu0 %v978
  %v1256 = vpop.f32.mrf.mxu0
  %v1257 = vadd.f32 %v1168, %v1256
  %v1258 = vpop.f32.mrf.mxu0
  %v1259 = vadd.f32 %v1170, %v1258
  %1260 = vmatmul.bf16.gmra.mxu0 %v979
  %v1261 = vpop.f32.mrf.mxu0
  %v1262 = vadd.f32 %v1173, %v1261
  %v1263 = vpop.f32.mrf.mxu0
  %v1264 = vadd.f32 %v1175, %v1263
  %1265 = vmatmul.bf16.gmra.mxu0 %v980
  %v1266 = vpop.f32.mrf.mxu0
  %v1267 = vadd.f32 %v1178, %v1266
  %v1268 = vpop.f32.mrf.mxu0
  %v1269 = vadd.f32 %v1180, %v1268
  %1270 = vmatmul.bf16.gmra.mxu0 %v981
  %v1271 = vpop.f32.mrf.mxu0
  %v1272 = vadd.f32 %v1183, %v1271
  %v1273 = vpop.f32.mrf.mxu0
  %v1274 = vadd.f32 %v1185, %v1273
  %1275 = vmatmul.bf16.gmra.mxu0 %v982
  %v1276 = vpop.f32.mrf.mxu0
  %v1277 = vadd.f32 %v1188, %v1276
  %v1278 = vpop.f32.mrf.mxu0
  %v1279 = vadd.f32 %v1190, %v1278
  %1280 = vmatmul.bf16.gmra.mxu0 %v983
  %v1281 = vpop.f32.mrf.mxu0
  %v1282 = vadd.f32 %v1193, %v1281
  %v1283 = vpop.f32.mrf.mxu0
  %v1284 = vadd.f32 %v1195, %v1283
  %1285 = vmatmul.bf16.gmra.mxu0 %v984
  %v1286 = vpop.f32.mrf.mxu0
  %v1287 = vadd.f32 %v1198, %v1286
  %v1288 = vpop.f32.mrf.mxu0
  %v1289 = vadd.f32 %v1200, %v1288
  %1290 = vmatmul.bf16.gmra.mxu0 %v985
  %v1291 = vpop.f32.mrf.mxu0
  %v1292 = vadd.f32 %v1203, %v1291
  %v1293 = vpop.f32.mrf.mxu0
  %v1294 = vadd.f32 %v1205, %v1293
  %1295 = vmatmul.bf16.gmra.mxu0 %v986
  %v1296 = vpop.f32.mrf.mxu0
  %v1297 = vadd.f32 %v1208, %v1296
  %v1298 = vpop.f32.mrf.mxu0
  %v1299 = vadd.f32 %v1210, %v1298
  %1300 = vmatmul.bf16.gmra.mxu0 %v987
  %v1301 = vpop.f32.mrf.mxu0
  %v1302 = vadd.f32 %v1213, %v1301
  %v1303 = vpop.f32.mrf.mxu0
  %v1304 = vadd.f32 %v1215, %v1303
  %1305 = vmatmul.bf16.gmra.mxu0 %v988
  %v1306 = vpop.f32.mrf.mxu0
  %v1307 = vadd.f32 %v1218, %v1306
  %v1308 = vpop.f32.mrf.mxu0
  %v1309 = vadd.f32 %v1220, %v1308
  %1310 = vmatmul.bf16.gmra.mxu0 %v989
  %v1311 = vpop.f32.mrf.mxu0
  %v1312 = vadd.f32 %v1223, %v1311
  %v1313 = vpop.f32.mrf.mxu0
  %v1314 = vadd.f32 %v1225, %v1313
  %1315 = vdwg.mxu0
  %v1316 = vmax.f32 %v1237, 0.0
  %v1317 = vmax.f32 %v1239, 0.0
  %v1318 = vmax.f32 %v1242, 0.0
  %v1319 = vmax.f32 %v1244, 0.0
  %v1320 = vmax.f32 %v1247, 0.0
  %v1321 = vmax.f32 %v1249, 0.0
  %v1322 = vmax.f32 %v1252, 0.0
  %v1323 = vmax.f32 %v1254, 0.0
  %v1324 = vmax.f32 %v1257, 0.0
  %v1325 = vmax.f32 %v1259, 0.0
  %v1326 = vmax.f32 %v1262, 0.0
  %v1327 = vmax.f32 %v1264, 0.0
  %v1328 = vmax.f32 %v1267, 0.0
  %v1329 = vmax.f32 %v1269, 0.0
  %v1330 = vmax.f32 %v1272, 0.0
  %v1331 = vmax.f32 %v1274, 0.0
  %v1332 = vmax.f32 %v1277, 0.0
  %v1333 = vmax.f32 %v1279, 0.0
  %v1334 = vmax.f32 %v1282, 0.0
  %v1335 = vmax.f32 %v1284, 0.0
  %v1336 = vmax.f32 %v1287, 0.0
  %v1337 = vmax.f32 %v1289, 0.0
  %v1338 = vmax.f32 %v1292, 0.0
  %v1339 = vmax.f32 %v1294, 0.0
  %v1340 = vmax.f32 %v1297, 0.0
  %v1341 = vmax.f32 %v1299, 0.0
  %v1342 = vmax.f32 %v1302, 0.0
  %v1343 = vmax.f32 %v1304, 0.0
  %v1344 = vmax.f32 %v1307, 0.0
  %v1345 = vmax.f32 %v1309, 0.0
  %v1346 = vmax.f32 %v1312, 0.0
  %v1347 = vmax.f32 %v1314, 0.0
  %v1348 = vld [vmem:[%s3] sm:$0xff]
  %v1349 = vld [vmem:[%s3 + $0x8] sm:$0xff]
  %v1350 = vld [vmem:[%s3 + $0x10] sm:$0xff]
  %v1351 = vld [vmem:[%s3 + $0x18] sm:$0xff]
  %v1352 = vld [vmem:[%s3 + $0x20] sm:$0xff]
  %v1353 = vld [vmem:[%s3 + $0x28] sm:$0xff]
  %v1354 = vld [vmem:[%s3 + $0x30] sm:$0xff]
  %v1355 = vld [vmem:[%s3 + $0x38] sm:$0xff]
  %v1356 = vld [vmem:[%s3 + $0x40] sm:$0xff]
  %v1357 = vld [vmem:[%s3 + $0x48] sm:$0xff]
  %v1358 = vld [vmem:[%s3 + $0x50] sm:$0xff]
  %v1359 = vld [vmem:[%s3 + $0x58] sm:$0xff]
  %v1360 = vld [vmem:[%s3 + $0x60] sm:$0xff]
  %v1361 = vld [vmem:[%s3 + $0x68] sm:$0xff]
  %v1362 = vld [vmem:[%s3 + $0x70] sm:$0xff]
  %v1363 = vld [vmem:[%s3 + $0x78] sm:$0xff]
  %v1364 = vld [vmem:[%s3 + $0x80] sm:$0xff]
  %v1365 = vld [vmem:[%s3 + $0x88] sm:$0xff]
  %v1366 = vld [vmem:[%s3 + $0x90] sm:$0xff]
  %v1367 = vld [vmem:[%s3 + $0x98] sm:$0xff]
  %v1368 = vld [vmem:[%s3 + $0xa0] sm:$0xff]
  %v1369 = vld [vmem:[%s3 + $0xa8] sm:$0xff]
  %v1370 = vld [vmem:[%s3 + $0xb0] sm:$0xff]
  %v1371 = vld [vmem:[%s3 + $0xb8] sm:$0xff]
  %v1372 = vld [vmem:[%s3 + $0xc0] sm:$0xff]
  %v1373 = vld [vmem:[%s3 + $0xc8] sm:$0xff]
  %v1374 = vld [vmem:[%s3 + $0xd0] sm:$0xff]
  %v1375 = vld [vmem:[%s3 + $0xd8] sm:$0xff]
  %v1376 = vld [vmem:[%s3 + $0xe0] sm:$0xff]
  %v1377 = vld [vmem:[%s3 + $0xe8] sm:$0xff]
  %v1378 = vld [vmem:[%s3 + $0xf0] sm:$0xff]
  %v1379 = vld [vmem:[%s3 + $0xf8] sm:$0xff]
  %1381 = vset.pattern.permute.xlu0 0
  %1382 = vperm.xlu0 %1381, %v1348
  %v1383 = vpop.permute.xlu0 %1382
  %1386 = vset.pattern.permute.xlu0 0
  %1387 = vperm.xlu0 %1386, %v1349
  %v1388 = vpop.permute.xlu0 %1387
  %1391 = vset.pattern.permute.xlu0 0
  %1392 = vperm.xlu0 %1391, %v1350
  %v1393 = vpop.permute.xlu0 %1392
  %1396 = vset.pattern.permute.xlu0 0
  %1397 = vperm.xlu0 %1396, %v1351
  %v1398 = vpop.permute.xlu0 %1397
  %1401 = vset.pattern.permute.xlu0 0
  %1402 = vperm.xlu0 %1401, %v1352
  %v1403 = vpop.permute.xlu0 %1402
  %1406 = vset.pattern.permute.xlu0 0
  %1407 = vperm.xlu0 %1406, %v1353
  %v1408 = vpop.permute.xlu0 %1407
  %1411 = vset.pattern.permute.xlu0 0
  %1412 = vperm.xlu0 %1411, %v1354
  %v1413 = vpop.permute.xlu0 %1412
  %1416 = vset.pattern.permute.xlu0 0
  %1417 = vperm.xlu0 %1416, %v1355
  %v1418 = vpop.permute.xlu0 %1417
  %1421 = vset.pattern.permute.xlu0 0
  %1422 = vperm.xlu0 %1421, %v1356
  %v1423 = vpop.permute.xlu0 %1422
  %1426 = vset.pattern.permute.xlu0 0
  %1427 = vperm.xlu0 %1426, %v1357
  %v1428 = vpop.permute.xlu0 %1427
  %1431 = vset.pattern.permute.xlu0 0
  %1432 = vperm.xlu0 %1431, %v1358
  %v1433 = vpop.permute.xlu0 %1432
  %1436 = vset.pattern.permute.xlu0 0
  %1437 = vperm.xlu0 %1436, %v1359
  %v1438 = vpop.permute.xlu0 %1437
  %1441 = vset.pattern.permute.xlu0 0
  %1442 = vperm.xlu0 %1441, %v1360
  %v1443 = vpop.permute.xlu0 %1442
  %1446 = vset.pattern.permute.xlu0 0
  %1447 = vperm.xlu0 %1446, %v1361
  %v1448 = vpop.permute.xlu0 %1447
  %1451 = vset.pattern.permute.xlu0 0
  %1452 = vperm.xlu0 %1451, %v1362
  %v1453 = vpop.permute.xlu0 %1452
  %1456 = vset.pattern.permute.xlu0 0
  %1457 = vperm.xlu0 %1456, %v1363
  %v1458 = vpop.permute.xlu0 %1457
  %1461 = vset.pattern.permute.xlu0 0
  %1462 = vperm.xlu0 %1461, %v1364
  %v1463 = vpop.permute.xlu0 %1462
  %1466 = vset.pattern.permute.xlu0 0
  %1467 = vperm.xlu0 %1466, %v1365
  %v1468 = vpop.permute.xlu0 %1467
  %1471 = vset.pattern.permute.xlu0 0
  %1472 = vperm.xlu0 %1471, %v1366
  %v1473 = vpop.permute.xlu0 %1472
  %1476 = vset.pattern.permute.xlu0 0
  %1477 = vperm.xlu0 %1476, %v1367
  %v1478 = vpop.permute.xlu0 %1477
  %1481 = vset.pattern.permute.xlu0 0
  %1482 = vperm.xlu0 %1481, %v1368
  %v1483 = vpop.permute.xlu0 %1482
  %1486 = vset.pattern.permute.xlu0 0
  %1487 = vperm.xlu0 %1486, %v1369
  %v1488 = vpop.permute.xlu0 %1487
  %1491 = vset.pattern.permute.xlu0 0
  %1492 = vperm.xlu0 %1491, %v1370
  %v1493 = vpop.permute.xlu0 %1492
  %1496 = vset.pattern.permute.xlu0 0
  %1497 = vperm.xlu0 %1496, %v1371
  %v1498 = vpop.permute.xlu0 %1497
  %1501 = vset.pattern.permute.xlu0 0
  %1502 = vperm.xlu0 %1501, %v1372
  %v1503 = vpop.permute.xlu0 %1502
  %1506 = vset.pattern.permute.xlu0 0
  %1507 = vperm.xlu0 %1506, %v1373
  %v1508 = vpop.permute.xlu0 %1507
  %1511 = vset.pattern.permute.xlu0 0
  %1512 = vperm.xlu0 %1511, %v1374
  %v1513 = vpop.permute.xlu0 %1512
  %1516 = vset.pattern.permute.xlu0 0
  %1517 = vperm.xlu0 %1516, %v1375
  %v1518 = vpop.permute.xlu0 %1517
  %1521 = vset.pattern.permute.xlu0 0
  %1522 = vperm.xlu0 %1521, %v1376
  %v1523 = vpop.permute.xlu0 %1522
  %1526 = vset.pattern.permute.xlu0 0
  %1527 = vperm.xlu0 %1526, %v1377
  %v1528 = vpop.permute.xlu0 %1527
  %1531 = vset.pattern.permute.xlu0 0
  %1532 = vperm.xlu0 %1531, %v1378
  %v1533 = vpop.permute.xlu0 %1532
  %1536 = vset.pattern.permute.xlu0 0
  %1537 = vperm.xlu0 %1536, %v1379
  %v1538 = vpop.permute.xlu0 %1537
  %v1540 = vmul.f32 %v1316, %v1383
  %v1541 = vmul.f32 %v1317, %v1388
  %v1542 = vmul.f32 %v1318, %v1393
  %v1543 = vmul.f32 %v1319, %v1398
  %v1544 = vmul.f32 %v1320, %v1403
  %v1545 = vmul.f32 %v1321, %v1408
  %v1546 = vmul.f32 %v1322, %v1413
  %v1547 = vmul.f32 %v1323, %v1418
  %v1548 = vmul.f32 %v1324, %v1423
  %v1549 = vmul.f32 %v1325, %v1428
  %v1550 = vmul.f32 %v1326, %v1433
  %v1551 = vmul.f32 %v1327, %v1438
  %v1552 = vmul.f32 %v1328, %v1443
  %v1553 = vmul.f32 %v1329, %v1448
  %v1554 = vmul.f32 %v1330, %v1453
  %v1555 = vmul.f32 %v1331, %v1458
  %v1556 = vmul.f32 %v1332, %v1463
  %v1557 = vmul.f32 %v1333, %v1468
  %v1558 = vmul.f32 %v1334, %v1473
  %v1559 = vmul.f32 %v1335, %v1478
  %v1560 = vmul.f32 %v1336, %v1483
  %v1561 = vmul.f32 %v1337, %v1488
  %v1562 = vmul.f32 %v1338, %v1493
  %v1563 = vmul.f32 %v1339, %v1498
  %v1564 = vmul.f32 %v1340, %v1503
  %v1565 = vmul.f32 %v1341, %v1508
  %v1566 = vmul.f32 %v1342, %v1513
  %v1567 = vmul.f32 %v1343, %v1518
  %v1568 = vmul.f32 %v1344, %v1523
  %v1569 = vmul.f32 %v1345, %v1528
  %v1570 = vmul.f32 %v1346, %v1533
  %v1571 = vmul.f32 %v1347, %v1538
  %1572 = vst [vmem:[%s6] sm:$0xff] %v1540
  %1573 = vst [vmem:[%s6 + $0x8] sm:$0xff] %v1541
  %1574 = vst [vmem:[%s6 + $0x10] sm:$0xff] %v1542
  %1575 = vst [vmem:[%s6 + $0x18] sm:$0xff] %v1543
  %1576 = vst [vmem:[%s6 + $0x20] sm:$0xff] %v1544
  %1577 = vst [vmem:[%s6 + $0x28] sm:$0xff] %v1545
  %1578 = vst [vmem:[%s6 + $0x30] sm:$0xff] %v1546
  %1579 = vst [vmem:[%s6 + $0x38] sm:$0xff] %v1547
  %1580 = vst [vmem:[%s6 + $0x40] sm:$0xff] %v1548
  %1581 = vst [vmem:[%s6 + $0x48] sm:$0xff] %v1549
  %1582 = vst [vmem:[%s6 + $0x50] sm:$0xff] %v1550
  %1583 = vst [vmem:[%s6 + $0x58] sm:$0xff] %v1551
  %1584 = vst [vmem:[%s6 + $0x60] sm:$0xff] %v1552
  %1585 = vst [vmem:[%s6 + $0x68] sm:$0xff] %v1553
  %1586 = vst [vmem:[%s6 + $0x70] sm:$0xff] %v1554
  %1587 = vst [vmem:[%s6 + $0x78] sm:$0xff] %v1555
  %1588 = vst [vmem:[%s6 + $0x80] sm:$0xff] %v1556
  %1589 = vst [vmem:[%s6 + $0x88] sm:$0xff] %v1557
  %1590 = vst [vmem:[%s6 + $0x90] sm:$0xff] %v1558
  %1591 = vst [vmem:[%s6 + $0x98] sm:$0xff] %v1559
  %1592 = vst [vmem:[%s6 + $0xa0] sm:$0xff] %v1560
  %1593 = vst [vmem:[%s6 + $0xa8] sm:$0xff] %v1561
  %1594 = vst [vmem:[%s6 + $0xb0] sm:$0xff] %v1562
  %1595 = vst [vmem:[%s6 + $0xb8] sm:$0xff] %v1563
  %1596 = vst [vmem:[%s6 + $0xc0] sm:$0xff] %v1564
  %1597 = vst [vmem:[%s6 + $0xc8] sm:$0xff] %v1565
  %1598 = vst [vmem:[%s6 + $0xd0] sm:$0xff] %v1566
  %1599 = vst [vmem:[%s6 + $0xd8] sm:$0xff] %v1567
  %1600 = vst [vmem:[%s6 + $0xe0] sm:$0xff] %v1568
  %1601 = vst [vmem:[%s6 + $0xe8] sm:$0xff] %v1569
  %1602 = vst [vmem:[%s6 + $0xf0] sm:$0xff] %v1570
  %1603 = vst [vmem:[%s6 + $0xf8] sm:$0xff] %v1571
  // Predicated region
  $region26: #{forward.3} parent=0 // pred_check
    _
  $region27: #{forward.3} parent=0 // pred_check_branch
    %1605 = sbr.rel (0) target = $region29
  $region28: #{forward.3} parent=0 // pred_region
    _
  $region29: #{forward.3} parent=0 // pred_fallthru
    _
  // Predicated region
  $region30: #{forward.3} parent=0 // pred_check
    _
  $region31: #{forward.3} parent=0 // pred_check_branch
    %1607 = sbr.rel (0) target = $region33
  $region32: #{forward.3} parent=0 // pred_region
    _
  $region33: #{forward.3} parent=0 // pred_fallthru
    _

// kernel: forward.5
$region0: #{forward.5}
  #allocation0 [shape = 'u32[]', space=smem, size = 0x4, offset = 0x4, fixed_abs, tag = 'smem constant byte address 0x4 - core index']
  #allocation1 [shape = 'u32[72,128]{1,0:T(1,128)}', space=vmem, size = 0x9000, scoped, tag = 'internal scratch']
  %s0 = inlined_call_operand.vmem [shape: bf16[8,256], index: 0, kind: input, shape index: {}]
  %s1 = inlined_call_operand.vmem [shape: bf16[256,128], index: 1, kind: input, shape index: {}]
  %s2 = inlined_call_operand.vmem [shape: bf16[128,128], index: 2, kind: input, shape index: {}]
  %s3 = inlined_call_operand.vmem [shape: f32[1,128], index: 3, kind: input, shape index: {}]
  %s4 = inlined_call_operand.vmem [shape: bf16[128,128], index: 4, kind: input, shape index: {}]
  %s5 = inlined_call_operand.vmem [shape: f32[1,128], index: 5, kind: input, shape index: {}]
  %s6 = inlined_call_operand.vmem [shape: f32[8,128], index: 6, kind: output, shape index: {}]
  %s7 = sld [smem:[#allocation0]]
  $region34: #{forward.5} parent=0
    _
  %s9 = ssub.s32 1, %s7
  %s10 = scalar_select 0, %s9, %s7
  // Predicated region
  $region2: #{forward.5} parent=0 // pred_check
    _
  $region3: #{forward.5} parent=0 // pred_check_branch
    %12 = sbr.rel (0) target = $region5
  $region4: #{forward.5} parent=0 // pred_region
    _
  $region5: #{forward.5} parent=0 // pred_fallthru
    _
  // Predicated region
  $region6: #{forward.5} parent=0 // pred_check
    _
  $region7: #{forward.5} parent=0 // pred_check_branch
    %14 = sbr.rel (0) target = $region9
  $region8: #{forward.5} parent=0 // pred_region
    _
  $region9: #{forward.5} parent=0 // pred_fallthru
    _
  // Predicated region
  $region10: #{forward.5} parent=0 // pred_check
    _
  $region11: #{forward.5} parent=0 // pred_check_branch
    %16 = sbr.rel (0) target = $region13
  $region12: #{forward.5} parent=0 // pred_region
    _
  $region13: #{forward.5} parent=0 // pred_fallthru
    _
  // Predicated region
  $region14: #{forward.5} parent=0 // pred_check
    _
  $region15: #{forward.5} parent=0 // pred_check_branch
    %18 = sbr.rel (0) target = $region17
  $region16: #{forward.5} parent=0 // pred_region
    _
  $region17: #{forward.5} parent=0 // pred_fallthru
    _
  // Predicated region
  $region18: #{forward.5} parent=0 // pred_check
    _
  $region19: #{forward.5} parent=0 // pred_check_branch
    %20 = sbr.rel (0) target = $region21
  $region20: #{forward.5} parent=0 // pred_region
    _
  $region21: #{forward.5} parent=0 // pred_fallthru
    _
  // Predicated region
  $region22: #{forward.5} parent=0 // pred_check
    _
  $region23: #{forward.5} parent=0 // pred_check_branch
    %22 = sbr.rel (0) target = $region25
  $region24: #{forward.5} parent=0 // pred_region
    _
  $region25: #{forward.5} parent=0 // pred_fallthru
    _
  %v23 = vld [vmem:[%s0] sm:$0xff]
  %v24 = vld [vmem:[%s1] sm:$0xf]
  %v25 = vld [vmem:[%s1 + $0x4] sm:$0xf]
  %v26 = vld [vmem:[%s1 + $0x8] sm:$0xf]
  %v27 = vld [vmem:[%s1 + $0xc] sm:$0xf]
  %v28 = vld [vmem:[%s1 + $0x10] sm:$0xf]
  %v29 = vld [vmem:[%s1 + $0x14] sm:$0xf]
  %v30 = vld [vmem:[%s1 + $0x18] sm:$0xf]
  %v31 = vld [vmem:[%s1 + $0x1c] sm:$0xf]
  %v32 = vld [vmem:[%s1 + $0x20] sm:$0xf]
  %v33 = vld [vmem:[%s1 + $0x24] sm:$0xf]
  %v34 = vld [vmem:[%s1 + $0x28] sm:$0xf]
  %v35 = vld [vmem:[%s1 + $0x2c] sm:$0xf]
  %v36 = vld [vmem:[%s1 + $0x30] sm:$0xf]
  %v37 = vld [vmem:[%s1 + $0x34] sm:$0xf]
  %v38 = vld [vmem:[%s1 + $0x38] sm:$0xf]
  %v39 = vld [vmem:[%s1 + $0x3c] sm:$0xf]
  %v40 = vld [vmem:[%s1 + $0x40] sm:$0xf]
  %v41 = vld [vmem:[%s1 + $0x44] sm:$0xf]
  %v42 = vld [vmem:[%s1 + $0x48] sm:$0xf]
  %v43 = vld [vmem:[%s1 + $0x4c] sm:$0xf]
  %v44 = vld [vmem:[%s1 + $0x50] sm:$0xf]
  %v45 = vld [vmem:[%s1 + $0x54] sm:$0xf]
  %v46 = vld [vmem:[%s1 + $0x58] sm:$0xf]
  %v47 = vld [vmem:[%s1 + $0x5c] sm:$0xf]
  %v48 = vld [vmem:[%s1 + $0x60] sm:$0xf]
  %v49 = vld [vmem:[%s1 + $0x64] sm:$0xf]
  %v50 = vld [vmem:[%s1 + $0x68] sm:$0xf]
  %v51 = vld [vmem:[%s1 + $0x6c] sm:$0xf]
  %v52 = vld [vmem:[%s1 + $0x70] sm:$0xf]
  %v53 = vld [vmem:[%s1 + $0x74] sm:$0xf]
  %v54 = vld [vmem:[%s1 + $0x78] sm:$0xf]
  %v55 = vld [vmem:[%s1 + $0x7c] sm:$0xf]
  %v57 = vunpack.c.l.b16 %v23
  %v58 = vunpack.c.h.b16 %v23
  %v59 = vpack.c.b16 %v57, %v57
  %v60 = vpack.c.b16 %v58, %v58
  %v95 = vunpack.c.l.b16 %v24
  %v96 = vunpack.c.l.b16 %v25
  %v97 = vunpack.c.l.b16 %v26
  %v98 = vunpack.c.l.b16 %v27
  %v99 = vunpack.c.l.b16 %v28
  %v100 = vunpack.c.l.b16 %v29
  %v101 = vunpack.c.l.b16 %v30
  %v102 = vunpack.c.l.b16 %v31
  %v103 = vunpack.c.l.b16 %v32
  %v104 = vunpack.c.l.b16 %v33
  %v105 = vunpack.c.l.b16 %v34
  %v106 = vunpack.c.l.b16 %v35
  %v107 = vunpack.c.l.b16 %v36
  %v108 = vunpack.c.l.b16 %v37
  %v109 = vunpack.c.l.b16 %v38
  %v110 = vunpack.c.l.b16 %v39
  %v111 = vunpack.c.l.b16 %v40
  %v112 = vunpack.c.l.b16 %v41
  %v113 = vunpack.c.l.b16 %v42
  %v114 = vunpack.c.l.b16 %v43
  %v115 = vunpack.c.l.b16 %v44
  %v116 = vunpack.c.l.b16 %v45
  %v117 = vunpack.c.l.b16 %v46
  %v118 = vunpack.c.l.b16 %v47
  %v119 = vunpack.c.l.b16 %v48
  %v120 = vunpack.c.l.b16 %v49
  %v121 = vunpack.c.l.b16 %v50
  %v122 = vunpack.c.l.b16 %v51
  %v123 = vunpack.c.l.b16 %v52
  %v124 = vunpack.c.l.b16 %v53
  %v125 = vunpack.c.l.b16 %v54
  %v126 = vunpack.c.l.b16 %v55
  %v127 = vpack.c.b16 %v96, %v95
  %v128 = vpack.c.b16 %v98, %v97
  %v129 = vpack.c.b16 %v100, %v99
  %v130 = vpack.c.b16 %v102, %v101
  %v131 = vpack.c.b16 %v104, %v103
  %v132 = vpack.c.b16 %v106, %v105
  %v133 = vpack.c.b16 %v108, %v107
  %v134 = vpack.c.b16 %v110, %v109
  %v135 = vpack.c.b16 %v112, %v111
  %v136 = vpack.c.b16 %v114, %v113
  %v137 = vpack.c.b16 %v116, %v115
  %v138 = vpack.c.b16 %v118, %v117
  %v139 = vpack.c.b16 %v120, %v119
  %v140 = vpack.c.b16 %v122, %v121
  %v141 = vpack.c.b16 %v124, %v123
  %v142 = vpack.c.b16 %v126, %v125
  %159 = vmatpush.bf16.msra.mxu0 %v134
  %160 = vmatpush.bf16.msra.mxu0 %v133
  %161 = vmatpush.bf16.msra.mxu0 %v132
  %162 = vmatpush.bf16.msra.mxu0 %v131
  %163 = vmatpush.bf16.msra.mxu0 %v130
  %164 = vmatpush.bf16.msra.mxu0 %v129
  %165 = vmatpush.bf16.msra.mxu0 %v128
  %166 = vmatpush.bf16.msra.mxu0 %v127
  %167 = vmatmul.bf16.gmra.mxu0 %v59
  %v168 = vpop.f32.mrf.mxu0
  %v169 = vadd.f32 0.0, %v168
  %v170 = vpop.f32.mrf.mxu0
  %171 = vdwg.mxu0
  %172 = vmatpush.bf16.msra.mxu0 %v142
  %173 = vmatpush.bf16.msra.mxu0 %v141
  %174 = vmatpush.bf16.msra.mxu0 %v140
  %175 = vmatpush.bf16.msra.mxu0 %v139
  %176 = vmatpush.bf16.msra.mxu0 %v138
  %177 = vmatpush.bf16.msra.mxu0 %v137
  %178 = vmatpush.bf16.msra.mxu0 %v136
  %179 = vmatpush.bf16.msra.mxu0 %v135
  %180 = vmatmul.bf16.gmra.mxu0 %v60
  %v181 = vpop.f32.mrf.mxu0
  %v182 = vadd.f32 %v169, %v181
  %v183 = vpop.f32.mrf.mxu0
  %184 = vdwg.mxu0
  %v185 = vpack.c.bf16 %v182, %v182
  %v186 = vld [vmem:[%s2] sm:$0xf]
  %v187 = vld [vmem:[%s2 + $0x4] sm:$0xf]
  %v188 = vld [vmem:[%s2 + $0x8] sm:$0xf]
  %v189 = vld [vmem:[%s2 + $0xc] sm:$0xf]
  %v190 = vld [vmem:[%s2 + $0x10] sm:$0xf]
  %v191 = vld [vmem:[%s2 + $0x14] sm:$0xf]
  %v192 = vld [vmem:[%s2 + $0x18] sm:$0xf]
  %v193 = vld [vmem:[%s2 + $0x1c] sm:$0xf]
  %v194 = vld [vmem:[%s2 + $0x20] sm:$0xf]
  %v195 = vld [vmem:[%s2 + $0x24] sm:$0xf]
  %v196 = vld [vmem:[%s2 + $0x28] sm:$0xf]
  %v197 = vld [vmem:[%s2 + $0x2c] sm:$0xf]
  %v198 = vld [vmem:[%s2 + $0x30] sm:$0xf]
  %v199 = vld [vmem:[%s2 + $0x34] sm:$0xf]
  %v200 = vld [vmem:[%s2 + $0x38] sm:$0xf]
  %v201 = vld [vmem:[%s2 + $0x3c] sm:$0xf]
  %v202 = vld [vmem:[%s3] sm:$0x1]
  %v204 = vperm.slane %v202, 0
  %v222 = vunpack.c.l.b16 %v186
  %v223 = vunpack.c.l.b16 %v187
  %v224 = vunpack.c.l.b16 %v188
  %v225 = vunpack.c.l.b16 %v189
  %v226 = vunpack.c.l.b16 %v190
  %v227 = vunpack.c.l.b16 %v191
  %v228 = vunpack.c.l.b16 %v192
  %v229 = vunpack.c.l.b16 %v193
  %v230 = vunpack.c.l.b16 %v194
  %v231 = vunpack.c.l.b16 %v195
  %v232 = vunpack.c.l.b16 %v196
  %v233 = vunpack.c.l.b16 %v197
  %v234 = vunpack.c.l.b16 %v198
  %v235 = vunpack.c.l.b16 %v199
  %v236 = vunpack.c.l.b16 %v200
  %v237 = vunpack.c.l.b16 %v201
  %v238 = vpack.c.b16 %v223, %v222
  %v239 = vpack.c.b16 %v225, %v224
  %v240 = vpack.c.b16 %v227, %v226
  %v241 = vpack.c.b16 %v229, %v228
  %v242 = vpack.c.b16 %v231, %v230
  %v243 = vpack.c.b16 %v233, %v232
  %v244 = vpack.c.b16 %v235, %v234
  %v245 = vpack.c.b16 %v237, %v236
  %254 = vmatpush.bf16.msra.mxu0 %v245
  %255 = vmatpush.bf16.msra.mxu0 %v244
  %256 = vmatpush.bf16.msra.mxu0 %v243
  %257 = vmatpush.bf16.msra.mxu0 %v242
  %258 = vmatpush.bf16.msra.mxu0 %v241
  %259 = vmatpush.bf16.msra.mxu0 %v240
  %260 = vmatpush.bf16.msra.mxu0 %v239
  %261 = vmatpush.bf16.msra.mxu0 %v238
  %262 = vmatmul.bf16.gmra.mxu0 %v185
  %v263 = vpop.f32.mrf.mxu0
  %v264 = vadd.f32 %v204, %v263
  %v265 = vpop.f32.mrf.mxu0
  %266 = vdwg.mxu0
  %v267 = vmax.f32 %v264, 0.0
  %v268 = vpack.c.bf16 %v267, %v267
  %v269 = vld [vmem:[%s4] sm:$0xf]
  %v270 = vld [vmem:[%s4 + $0x4] sm:$0xf]
  %v271 = vld [vmem:[%s4 + $0x8] sm:$0xf]
  %v272 = vld [vmem:[%s4 + $0xc] sm:$0xf]
  %v273 = vld [vmem:[%s4 + $0x10] sm:$0xf]
  %v274 = vld [vmem:[%s4 + $0x14] sm:$0xf]
  %v275 = vld [vmem:[%s4 + $0x18] sm:$0xf]
  %v276 = vld [vmem:[%s4 + $0x1c] sm:$0xf]
  %v277 = vld [vmem:[%s4 + $0x20] sm:$0xf]
  %v278 = vld [vmem:[%s4 + $0x24] sm:$0xf]
  %v279 = vld [vmem:[%s4 + $0x28] sm:$0xf]
  %v280 = vld [vmem:[%s4 + $0x2c] sm:$0xf]
  %v281 = vld [vmem:[%s4 + $0x30] sm:$0xf]
  %v282 = vld [vmem:[%s4 + $0x34] sm:$0xf]
  %v283 = vld [vmem:[%s4 + $0x38] sm:$0xf]
  %v284 = vld [vmem:[%s4 + $0x3c] sm:$0xf]
  %v285 = vld [vmem:[%s5] sm:$0x1]
  %v287 = vperm.slane %v285, 0
  %v305 = vunpack.c.l.b16 %v269
  %v306 = vunpack.c.l.b16 %v270
  %v307 = vunpack.c.l.b16 %v271
  %v308 = vunpack.c.l.b16 %v272
  %v309 = vunpack.c.l.b16 %v273
  %v310 = vunpack.c.l.b16 %v274
  %v311 = vunpack.c.l.b16 %v275
  %v312 = vunpack.c.l.b16 %v276
  %v313 = vunpack.c.l.b16 %v277
  %v314 = vunpack.c.l.b16 %v278
  %v315 = vunpack.c.l.b16 %v279
  %v316 = vunpack.c.l.b16 %v280
  %v317 = vunpack.c.l.b16 %v281
  %v318 = vunpack.c.l.b16 %v282
  %v319 = vunpack.c.l.b16 %v283
  %v320 = vunpack.c.l.b16 %v284
  %v321 = vpack.c.b16 %v306, %v305
  %v322 = vpack.c.b16 %v308, %v307
  %v323 = vpack.c.b16 %v310, %v309
  %v324 = vpack.c.b16 %v312, %v311
  %v325 = vpack.c.b16 %v314, %v313
  %v326 = vpack.c.b16 %v316, %v315
  %v327 = vpack.c.b16 %v318, %v317
  %v328 = vpack.c.b16 %v320, %v319
  %337 = vmatpush.bf16.msra.mxu0 %v328
  %338 = vmatpush.bf16.msra.mxu0 %v327
  %339 = vmatpush.bf16.msra.mxu0 %v326
  %340 = vmatpush.bf16.msra.mxu0 %v325
  %341 = vmatpush.bf16.msra.mxu0 %v324
  %342 = vmatpush.bf16.msra.mxu0 %v323
  %343 = vmatpush.bf16.msra.mxu0 %v322
  %344 = vmatpush.bf16.msra.mxu0 %v321
  %345 = vmatmul.bf16.gmra.mxu0 %v268
  %v346 = vpop.f32.mrf.mxu0
  %v347 = vadd.f32 %v287, %v346
  %v348 = vpop.f32.mrf.mxu0
  %349 = vdwg.mxu0
  %350 = vmax.xlane.f32.xlu0 %v347
  %v351 = vpop.xlane.xlu0 %350
  %v352 = vsub.f32 %v347, %v351
  %v353 = vmul.f32 %v352, 1.442695
  %v354 = vpow.pop %v353
  %355 = vadd.xlane.f32.xlu0 %v354
  %v356 = vpop.xlane.xlu0 %355
  %v357 = vlog2.pop %v356
  %v358 = vmul.f32 %v357, 0.6931472
  %v359 = vadd.f32 %v351, %v358
  %v360 = vsub.f32 %v347, %v359
  %361 = vst [vmem:[%s6] sm:$0xff] %v360
  // Predicated region
  $region26: #{forward.5} parent=0 // pred_check
    _
  $region27: #{forward.5} parent=0 // pred_check_branch
    %363 = sbr.rel (0) target = $region29
  $region28: #{forward.5} parent=0 // pred_region
    _
  $region29: #{forward.5} parent=0 // pred_fallthru
    _
  // Predicated region
  $region30: #{forward.5} parent=0 // pred_check
    _
  $region31: #{forward.5} parent=0 // pred_check_branch
    %365 = sbr.rel (0) target = $region33
  $region32: #{forward.5} parent=0 // pred_region
    _
  $region33: #{forward.5} parent=0 // pred_fallthru
    _

</llo_original>
